<compile_context>
chip_gen: v7x
topology: tpu7x:2x2x1
jax: 0.10.0
libtpu: 0.0.40
codegen_flags: <defaults>
</compile_context>

<pallas_src>
import math
import numpy as np

import jax
import jax.numpy as jnp
from jax.experimental import pallas as pl
from jax.experimental.pallas import tpu as pltpu

# ----------------------------- problem sizes -------------------------------
N, C, H, W = 2, 8, 16, 16
HW = H * W
CR = 2                    # CBAM MLP hidden width (reduction = 4 -> C // 4)
X_SCALE = 1.7             # deterministic stand-in for random.uniform(1, 3)
BN_EPS = 1e-5


# ------------------------------ fused kernel --------------------------------
def duqi_kernel(x_ref, meanw_ref, sumh_ref, reph_ref, tilew_ref,
                sshift_ref, wall_ref, bias_ref, w1_ref, w2_ref, spt_ref,
                o_ref):
    xf = x_ref[0]                                          # (C, HW) lane-dense

    # ---- pooled branch: AdaptiveAvgPool2d((None, 1)) + 2 BasicBlock1 ----
    v = jnp.dot(xf, meanw_ref[...], preferred_element_type=jnp.float32)  # (C,H)

    s_m = sshift_ref[0]            # picks h_in = h - 1   (kh = 0 tap)
    s_p = sshift_ref[1]            # picks h_in = h + 1   (kh = 2 tap)

    def conv_bn(u, i):
        # 3x3 conv on a width-1 map: only the center kernel column acts.
        # wall[i] holds the BN-scale-folded taps stacked as (3C, C).
        m = jnp.dot(wall_ref[i], u, preferred_element_type=jnp.float32)  # (3C,H)
        out = (jnp.dot(m[:C], s_m, preferred_element_type=jnp.float32)
               + m[C:2 * C]
               + jnp.dot(m[2 * C:], s_p, preferred_element_type=jnp.float32))
        return out + bias_ref[:, i:i + 1]                  # BN beta

    def block(u, i):                                       # BasicBlock1
        o1 = jnp.maximum(conv_bn(u, 2 * i), 0.0)
        o2 = conv_bn(o1, 2 * i + 1)
        return jnp.maximum(o2 + u, 0.0)

    g = block(block(v, 0), 1)                              # sc(sc1(.)) -> (C,H)

    # ---- gaussian of the H-norm, broadcast product, tanh ----
    ss = jnp.dot(xf * xf, sumh_ref[...],
                 preferred_element_type=jnp.float32)       # (C, W) = ||x||_H^2
    gauss = (2.0 * math.pi) * jnp.exp(ss * (-0.5 * X_SCALE))
    g_full = jnp.dot(g, reph_ref[...],
                     preferred_element_type=jnp.float32)   # (C, HW), repeat W
    gs_full = jnp.dot(gauss, tilew_ref[...],
                      preferred_element_type=jnp.float32)  # (C, HW), tile H
    t = jnp.tanh(g_full * gs_full)                         # (C, HW)

    # ---- CBAM: channel attention (max/mean descriptors stacked -> 1 MLP) ----
    mx = jnp.max(t, axis=1, keepdims=True)                 # (C, 1)
    av = jnp.mean(t, axis=1, keepdims=True)                # (C, 1)
    z = jnp.concatenate([mx, av], axis=1)                  # (C, 2)
    h1 = jnp.maximum(
        jnp.dot(w1_ref[...], z, preferred_element_type=jnp.float32), 0.0)  # (CR,2)
    o2 = jnp.dot(w2_ref[...], h1, preferred_element_type=jnp.float32)      # (C, 2)
    t = t * jax.nn.sigmoid(o2[:, 0:1] + o2[:, 1:2])        # mlp(max)+mlp(mean)

    # ---- CBAM: spatial attention (7x7 conv as two dense (HW,HW) operators) --
    pmax = jnp.max(t, axis=0, keepdims=True)               # (1, HW)
    pmean = jnp.mean(t, axis=0, keepdims=True)             # (1, HW)
    sp = jax.nn.sigmoid(
        jnp.dot(pmax, spt_ref[0], preferred_element_type=jnp.float32)
        + jnp.dot(pmean, spt_ref[1], preferred_element_type=jnp.float32))
    t = t * sp

    o_ref[0] = t * xf                                      # torch.mul(.., inputs1)


# ------------------------------- wrapper ------------------------------------
def duqi_pallas(x, packed):
    n = x.shape[0]
    assert x.shape[1:] == (C, H, W)
    xf = x.reshape(n, C, HW)                               # free reshape (XLA)

    out = pl.pallas_call(
        duqi_kernel,
        out_shape=jax.ShapeDtypeStruct((n, C, HW), jnp.float32),
        grid=(n,),
        in_specs=[
            pl.BlockSpec((1, C, HW), lambda i: (i, 0, 0)),      # x (flattened)
            pl.BlockSpec((HW, H), lambda i: (0, 0)),            # mean-over-W op
            pl.BlockSpec((HW, W), lambda i: (0, 0)),            # sum-over-H op
            pl.BlockSpec((H, HW), lambda i: (0, 0)),            # repeat-over-W op
            pl.BlockSpec((W, HW), lambda i: (0, 0)),            # tile-over-H op
            pl.BlockSpec((2, H, H), lambda i: (0, 0, 0)),       # H shift mats
            pl.BlockSpec((4, 3 * C, C), lambda i: (0, 0, 0)),   # BN-folded taps
            pl.BlockSpec((C, 4), lambda i: (0, 0)),             # BN betas
            pl.BlockSpec((CR, C), lambda i: (0, 0)),            # CBAM MLP W1
            pl.BlockSpec((C, CR), lambda i: (0, 0)),            # CBAM MLP W2
            pl.BlockSpec((2, HW, HW), lambda i: (0, 0, 0)),     # 7x7 spatial op
        ],
        out_specs=pl.BlockSpec((1, C, HW), lambda i: (i, 0, 0)),
        compiler_params=pltpu.CompilerParams(
            dimension_semantics=("parallel",)),
    )(xf, packed["meanw"], packed["sumh"], packed["reph"], packed["tilew"],
      packed["sshift"], packed["wall"], packed["bias"], packed["w1"],
      packed["w2"], packed["spt"])

    return out.reshape(n, C, H, W)


# --------------------------- parameters (synthetic) --------------------------
def make_params(key):
    ks = jax.random.split(key, 15)

    def rnd(k, shape, scale=0.1):
        return scale * jax.random.normal(k, shape, dtype=jnp.float32)

    conv_w = [rnd(ks[i], (C, C, 3, 3)) for i in range(4)]      # sc1.c1, sc1.c2, sc.c1, sc.c2
    bn_gamma = [1.0 + rnd(ks[4 + i], (C,)) for i in range(4)]
    bn_beta = [rnd(ks[8 + i], (C,)) for i in range(4)]
    mlp1 = rnd(ks[12], (CR, C))          # CBAM Conv2d(C, C//r, 1).weight[:, :, 0, 0]
    mlp2 = rnd(ks[13], (C, CR))          # CBAM Conv2d(C//r, C, 1).weight[:, :, 0, 0]
    spw = rnd(ks[14], (2, 7, 7))         # CBAM Conv2d(2, 1, 7).weight[0]

    raw = dict(conv_w=conv_w, bn_gamma=bn_gamma, bn_beta=bn_beta,
               mlp1=mlp1, mlp2=mlp2, spw=spw)

    # ---- kernel-side packing (all host-side numpy) ----
    # pooled-branch conv taps (center kernel column), BN scale folded in,
    # stacked per H-tap as (3C, C)
    wall = np.zeros((4, 3 * C, C), np.float32)
    bias = np.zeros((C, 4), np.float32)
    for i in range(4):
        w = np.asarray(conv_w[i])                                   # (C,C,3,3)
        scale = np.asarray(bn_gamma[i]) / np.sqrt(1.0 + BN_EPS)     # (C,)
        for kh in range(3):
            wall[i, kh * C:(kh + 1) * C, :] = scale[:, None] * w[:, :, kh, 1]
        bias[:, i] = np.asarray(bn_beta[i])

    # zero-padded H index shifts realized as matmuls
    sshift = np.stack([np.eye(H, k=1, dtype=np.float32),    # h_in = h-1
                       np.eye(H, k=-1, dtype=np.float32)])  # h_in = h+1

    # layout operators: (C, HW) <-> (C, H) / (C, W) without in-kernel reshapes
    eyeH = np.eye(H, dtype=np.float32)
    eyeW = np.eye(W, dtype=np.float32)
    meanw = np.repeat(eyeH, W, axis=0) / float(W)   # (HW, H): mean over W
    sumh = np.tile(eyeW, (H, 1))                    # (HW, W): sum over H
    reph = np.repeat(eyeH, W, axis=1)               # (H, HW): repeat along W
    tilew = np.tile(eyeW, (1, H))                   # (W, HW): tile along H

    # CBAM 7x7 spatial conv (pad 3, no bias) baked into dense operators:
    # sp = sigmoid(pmax_flat @ spt[0] + pmean_flat @ spt[1])
    spw_np = np.asarray(spw)
    spt = np.zeros((2, HW, HW), np.float32)
    for kh in range(7):
        for kw in range(7):
            dh, dw = kh - 3, kw - 3
            for ho in range(H):
                hi = ho + dh
                if hi < 0 or hi >= H:
                    continue
                for wo in range(W):
                    wi = wo + dw
                    if wi < 0 or wi >= W:
                        continue
                    spt[:, hi * W + wi, ho * W + wo] += spw_np[:, kh, kw]

    packed = dict(
        meanw=jnp.asarray(meanw), sumh=jnp.asarray(sumh),
        reph=jnp.asarray(reph), tilew=jnp.asarray(tilew),
        sshift=jnp.asarray(sshift), wall=jnp.asarray(wall),
        bias=jnp.asarray(bias), w1=jnp.asarray(mlp1), w2=jnp.asarray(mlp2),
        spt=jnp.asarray(spt))
    return raw, packed


# ------------------------ plain-JAX reference (check) ------------------------
def reference(x, raw):
    conv_w, bn_gamma, bn_beta = raw["conv_w"], raw["bn_gamma"], raw["bn_beta"]
    mlp1, mlp2, spw = raw["mlp1"], raw["mlp2"], raw["spw"]
    hp = jax.lax.Precision.HIGHEST

    def conv(v, w, pad):
        return jax.lax.conv_general_dilated(
            v, w, (1, 1), ((pad, pad), (pad, pad)),
            dimension_numbers=("NCHW", "OIHW", "NCHW"), precision=hp)

    def bn(v, g, b):
        return v * (g / jnp.sqrt(1.0 + BN_EPS)).reshape(1, -1, 1, 1) \
               + b.reshape(1, -1, 1, 1)

    def block(v, i):
        out = jnp.maximum(bn(conv(v, conv_w[2 * i], 1),
                             bn_gamma[2 * i], bn_beta[2 * i]), 0.0)
        out = bn(conv(out, conv_w[2 * i + 1], 1),
                 bn_gamma[2 * i + 1], bn_beta[2 * i + 1])
        return jnp.maximum(out + v, 0.0)

    g = jnp.mean(x, axis=3, keepdims=True)                      # pool2
    ss = jnp.sum(x * x, axis=2, keepdims=True)                  # ||x||_H ^ 2
    gauss = 2.0 * math.pi * jnp.exp(-(ss * 0.5 * X_SCALE))
    g = block(g, 0)                                             # sc1
    g = block(g, 1)                                             # sc
    t = jnp.tanh(g * gauss)

    avg = jnp.mean(t, axis=(2, 3), keepdims=True)
    mx = jnp.max(t, axis=(2, 3), keepdims=True)

    def mlp(z):
        hdn = jnp.maximum(jnp.einsum("rc,ncij->nrij", mlp1, z, precision=hp), 0.0)
        return jnp.einsum("cr,nrij->ncij", mlp2, hdn, precision=hp)

    t = t * jax.nn.sigmoid(mlp(mx) + mlp(avg))
    sp_in = jnp.concatenate([jnp.max(t, axis=1, keepdims=True),
                             jnp.mean(t, axis=1, keepdims=True)], axis=1)
    t = t * jax.nn.sigmoid(conv(sp_in, spw[None], 3))
    return t * x


# ---------------------------------- main -------------------------------------
if __name__ == "__main__":
    key = jax.random.PRNGKey(0)
    kx, kp = jax.random.split(key)
    x = 0.25 * jax.random.normal(kx, (N, C, H, W), dtype=jnp.float32)
    raw, packed = make_params(kp)

    out = duqi_pallas(x, packed)
    out = jax.block_until_ready(out)

    assert out.shape == (N, C, H, W)
    assert bool(jnp.all(jnp.isfinite(out)))

    ref = jax.block_until_ready(reference(x, raw))
    np.testing.assert_allclose(np.asarray(out), np.asarray(ref),
                               rtol=2e-3, atol=5e-4)
    print("KERNEL_OK")
</pallas_src>

<mosaic_0001>
module attributes {stable_mosaic.version = 11 : i64} {
  func.func @duqi_kernel(%arg0: i32, %arg1: memref<1x8x256xf32, #tpu.memory_space<vmem>>, %arg2: memref<256x16xf32, #tpu.memory_space<vmem>>, %arg3: memref<256x16xf32, #tpu.memory_space<vmem>>, %arg4: memref<16x256xf32, #tpu.memory_space<vmem>>, %arg5: memref<16x256xf32, #tpu.memory_space<vmem>>, %arg6: memref<2x16x16xf32, #tpu.memory_space<vmem>>, %arg7: memref<4x24x8xf32, #tpu.memory_space<vmem>>, %arg8: memref<8x4xf32, #tpu.memory_space<vmem>>, %arg9: memref<2x8xf32, #tpu.memory_space<vmem>>, %arg10: memref<8x2xf32, #tpu.memory_space<vmem>>, %arg11: memref<2x256x256xf32, #tpu.memory_space<vmem>>, %arg12: memref<1x8x256xf32, #tpu.memory_space<vmem>>) attributes {dimension_semantics = [#tpu.dimension_semantics<parallel>], iteration_bounds = array<i64: 2>, scalar_prefetch = 0 : i64, scratch_operands = 0 : i64, tpu.core_type = #tpu.core_type<tc>, window_params = [{transform_indices = @transform_0, window_bounds = array<i64: 1, 8, 256>}, {pipeline_mode = #tpu.pipeline_mode<synchronous>, transform_indices = @transform_1, window_bounds = array<i64: 256, 16>}, {pipeline_mode = #tpu.pipeline_mode<synchronous>, transform_indices = @transform_2, window_bounds = array<i64: 256, 16>}, {pipeline_mode = #tpu.pipeline_mode<synchronous>, transform_indices = @transform_3, window_bounds = array<i64: 16, 256>}, {pipeline_mode = #tpu.pipeline_mode<synchronous>, transform_indices = @transform_4, window_bounds = array<i64: 16, 256>}, {pipeline_mode = #tpu.pipeline_mode<synchronous>, transform_indices = @transform_5, window_bounds = array<i64: 2, 16, 16>}, {pipeline_mode = #tpu.pipeline_mode<synchronous>, transform_indices = @transform_6, window_bounds = array<i64: 4, 24, 8>}, {pipeline_mode = #tpu.pipeline_mode<synchronous>, transform_indices = @transform_7, window_bounds = array<i64: 8, 4>}, {pipeline_mode = #tpu.pipeline_mode<synchronous>, transform_indices = @transform_8, window_bounds = array<i64: 2, 8>}, {pipeline_mode = #tpu.pipeline_mode<synchronous>, transform_indices = @transform_9, window_bounds = array<i64: 8, 2>}, {pipeline_mode = #tpu.pipeline_mode<synchronous>, transform_indices = @transform_10, window_bounds = array<i64: 2, 256, 256>}, {transform_indices = @transform_11, window_bounds = array<i64: 1, 8, 256>}]} {
    %c0 = arith.constant 0 : index
    %c0_0 = arith.constant 0 : index
    %c0_1 = arith.constant 0 : index
    %0 = vector.load %arg1[%c0, %c0_0, %c0_1] : memref<1x8x256xf32, #tpu.memory_space<vmem>>, vector<1x8x256xf32>
    %1 = vector.shape_cast %0 : vector<1x8x256xf32> to vector<8x256xf32>
    %c0_2 = arith.constant 0 : index
    %c0_3 = arith.constant 0 : index
    %2 = vector.load %arg2[%c0_2, %c0_3] : memref<256x16xf32, #tpu.memory_space<vmem>>, vector<256x16xf32>
    %cst = arith.constant dense<0.000000e+00> : vector<8x16xf32>
    %3 = tpu.matmul %1, %2, %cst {dimension_numbers = #tpu.dot_dimension_numbers<[1], [0], [0], [1], [0, 0, 1, 1], [], []>} : vector<8x256xf32>, vector<256x16xf32>, vector<8x16xf32> -> vector<8x16xf32>
    %c0_4 = arith.constant 0 : index
    %c0_5 = arith.constant 0 : index
    %c0_6 = arith.constant 0 : index
    %4 = vector.load %arg6[%c0_4, %c0_5, %c0_6] : memref<2x16x16xf32, #tpu.memory_space<vmem>>, vector<1x16x16xf32>
    %5 = vector.shape_cast %4 : vector<1x16x16xf32> to vector<16x16xf32>
    %c1 = arith.constant 1 : index
    %c0_7 = arith.constant 0 : index
    %c0_8 = arith.constant 0 : index
    %6 = vector.load %arg6[%c1, %c0_7, %c0_8] : memref<2x16x16xf32, #tpu.memory_space<vmem>>, vector<1x16x16xf32>
    %7 = vector.shape_cast %6 : vector<1x16x16xf32> to vector<16x16xf32>
    %c0_9 = arith.constant 0 : index
    %c0_10 = arith.constant 0 : index
    %c0_11 = arith.constant 0 : index
    %8 = vector.load %arg7[%c0_9, %c0_10, %c0_11] : memref<4x24x8xf32, #tpu.memory_space<vmem>>, vector<1x24x8xf32>
    %9 = vector.shape_cast %8 : vector<1x24x8xf32> to vector<24x8xf32>
    %cst_12 = arith.constant dense<0.000000e+00> : vector<24x16xf32>
    %10 = tpu.matmul %9, %3, %cst_12 {dimension_numbers = #tpu.dot_dimension_numbers<[1], [0], [0], [1], [0, 0, 1, 1], [], []>} : vector<24x8xf32>, vector<8x16xf32>, vector<24x16xf32> -> vector<24x16xf32>
    %11 = vector.extract_strided_slice %10 {offsets = [0, 0], sizes = [8, 16], strides = [1, 1]} : vector<24x16xf32> to vector<8x16xf32>
    %cst_13 = arith.constant dense<0.000000e+00> : vector<8x16xf32>
    %12 = tpu.matmul %11, %5, %cst_13 {dimension_numbers = #tpu.dot_dimension_numbers<[1], [0], [0], [1], [0, 0, 1, 1], [], []>} : vector<8x16xf32>, vector<16x16xf32>, vector<8x16xf32> -> vector<8x16xf32>
    %13 = vector.extract_strided_slice %10 {offsets = [8, 0], sizes = [8, 16], strides = [1, 1]} : vector<24x16xf32> to vector<8x16xf32>
    %14 = arith.addf %12, %13 : vector<8x16xf32>
    %15 = vector.extract_strided_slice %10 {offsets = [16, 0], sizes = [8, 16], strides = [1, 1]} : vector<24x16xf32> to vector<8x16xf32>
    %cst_14 = arith.constant dense<0.000000e+00> : vector<8x16xf32>
    %16 = tpu.matmul %15, %7, %cst_14 {dimension_numbers = #tpu.dot_dimension_numbers<[1], [0], [0], [1], [0, 0, 1, 1], [], []>} : vector<8x16xf32>, vector<16x16xf32>, vector<8x16xf32> -> vector<8x16xf32>
    %17 = arith.addf %14, %16 : vector<8x16xf32>
    %c0_15 = arith.constant 0 : index
    %c0_16 = arith.constant 0 : index
    %18 = vector.load %arg8[%c0_15, %c0_16] : memref<8x4xf32, #tpu.memory_space<vmem>>, vector<8x1xf32>
    %19 = vector.broadcast %18 : vector<8x1xf32> to vector<8x16xf32>
    %20 = arith.addf %17, %19 : vector<8x16xf32>
    %cst_17 = arith.constant 0.000000e+00 : f32
    %21 = vector.broadcast %cst_17 : f32 to vector<8x16xf32>
    %22 = arith.maximumf %20, %21 : vector<8x16xf32>
    %c1_18 = arith.constant 1 : index
    %c0_19 = arith.constant 0 : index
    %c0_20 = arith.constant 0 : index
    %23 = vector.load %arg7[%c1_18, %c0_19, %c0_20] : memref<4x24x8xf32, #tpu.memory_space<vmem>>, vector<1x24x8xf32>
    %24 = vector.shape_cast %23 : vector<1x24x8xf32> to vector<24x8xf32>
    %cst_21 = arith.constant dense<0.000000e+00> : vector<24x16xf32>
    %25 = tpu.matmul %24, %22, %cst_21 {dimension_numbers = #tpu.dot_dimension_numbers<[1], [0], [0], [1], [0, 0, 1, 1], [], []>} : vector<24x8xf32>, vector<8x16xf32>, vector<24x16xf32> -> vector<24x16xf32>
    %26 = vector.extract_strided_slice %25 {offsets = [0, 0], sizes = [8, 16], strides = [1, 1]} : vector<24x16xf32> to vector<8x16xf32>
    %cst_22 = arith.constant dense<0.000000e+00> : vector<8x16xf32>
    %27 = tpu.matmul %26, %5, %cst_22 {dimension_numbers = #tpu.dot_dimension_numbers<[1], [0], [0], [1], [0, 0, 1, 1], [], []>} : vector<8x16xf32>, vector<16x16xf32>, vector<8x16xf32> -> vector<8x16xf32>
    %28 = vector.extract_strided_slice %25 {offsets = [8, 0], sizes = [8, 16], strides = [1, 1]} : vector<24x16xf32> to vector<8x16xf32>
    %29 = arith.addf %27, %28 : vector<8x16xf32>
    %30 = vector.extract_strided_slice %25 {offsets = [16, 0], sizes = [8, 16], strides = [1, 1]} : vector<24x16xf32> to vector<8x16xf32>
    %cst_23 = arith.constant dense<0.000000e+00> : vector<8x16xf32>
    %31 = tpu.matmul %30, %7, %cst_23 {dimension_numbers = #tpu.dot_dimension_numbers<[1], [0], [0], [1], [0, 0, 1, 1], [], []>} : vector<8x16xf32>, vector<16x16xf32>, vector<8x16xf32> -> vector<8x16xf32>
    %32 = arith.addf %29, %31 : vector<8x16xf32>
    %c0_24 = arith.constant 0 : index
    %c1_25 = arith.constant 1 : index
    %33 = vector.load %arg8[%c0_24, %c1_25] : memref<8x4xf32, #tpu.memory_space<vmem>>, vector<8x1xf32>
    %34 = vector.broadcast %33 : vector<8x1xf32> to vector<8x16xf32>
    %35 = arith.addf %32, %34 : vector<8x16xf32>
    %36 = arith.addf %35, %3 : vector<8x16xf32>
    %cst_26 = arith.constant 0.000000e+00 : f32
    %37 = vector.broadcast %cst_26 : f32 to vector<8x16xf32>
    %38 = arith.maximumf %36, %37 : vector<8x16xf32>
    %c2 = arith.constant 2 : index
    %c0_27 = arith.constant 0 : index
    %c0_28 = arith.constant 0 : index
    %39 = vector.load %arg7[%c2, %c0_27, %c0_28] : memref<4x24x8xf32, #tpu.memory_space<vmem>>, vector<1x24x8xf32>
    %40 = vector.shape_cast %39 : vector<1x24x8xf32> to vector<24x8xf32>
    %cst_29 = arith.constant dense<0.000000e+00> : vector<24x16xf32>
    %41 = tpu.matmul %40, %38, %cst_29 {dimension_numbers = #tpu.dot_dimension_numbers<[1], [0], [0], [1], [0, 0, 1, 1], [], []>} : vector<24x8xf32>, vector<8x16xf32>, vector<24x16xf32> -> vector<24x16xf32>
    %42 = vector.extract_strided_slice %41 {offsets = [0, 0], sizes = [8, 16], strides = [1, 1]} : vector<24x16xf32> to vector<8x16xf32>
    %cst_30 = arith.constant dense<0.000000e+00> : vector<8x16xf32>
    %43 = tpu.matmul %42, %5, %cst_30 {dimension_numbers = #tpu.dot_dimension_numbers<[1], [0], [0], [1], [0, 0, 1, 1], [], []>} : vector<8x16xf32>, vector<16x16xf32>, vector<8x16xf32> -> vector<8x16xf32>
    %44 = vector.extract_strided_slice %41 {offsets = [8, 0], sizes = [8, 16], strides = [1, 1]} : vector<24x16xf32> to vector<8x16xf32>
    %45 = arith.addf %43, %44 : vector<8x16xf32>
    %46 = vector.extract_strided_slice %41 {offsets = [16, 0], sizes = [8, 16], strides = [1, 1]} : vector<24x16xf32> to vector<8x16xf32>
    %cst_31 = arith.constant dense<0.000000e+00> : vector<8x16xf32>
    %47 = tpu.matmul %46, %7, %cst_31 {dimension_numbers = #tpu.dot_dimension_numbers<[1], [0], [0], [1], [0, 0, 1, 1], [], []>} : vector<8x16xf32>, vector<16x16xf32>, vector<8x16xf32> -> vector<8x16xf32>
    %48 = arith.addf %45, %47 : vector<8x16xf32>
    %c0_32 = arith.constant 0 : index
    %c2_33 = arith.constant 2 : index
    %49 = vector.load %arg8[%c0_32, %c2_33] : memref<8x4xf32, #tpu.memory_space<vmem>>, vector<8x1xf32>
    %50 = vector.broadcast %49 : vector<8x1xf32> to vector<8x16xf32>
    %51 = arith.addf %48, %50 : vector<8x16xf32>
    %cst_34 = arith.constant 0.000000e+00 : f32
    %52 = vector.broadcast %cst_34 : f32 to vector<8x16xf32>
    %53 = arith.maximumf %51, %52 : vector<8x16xf32>
    %c3 = arith.constant 3 : index
    %c0_35 = arith.constant 0 : index
    %c0_36 = arith.constant 0 : index
    %54 = vector.load %arg7[%c3, %c0_35, %c0_36] : memref<4x24x8xf32, #tpu.memory_space<vmem>>, vector<1x24x8xf32>
    %55 = vector.shape_cast %54 : vector<1x24x8xf32> to vector<24x8xf32>
    %cst_37 = arith.constant dense<0.000000e+00> : vector<24x16xf32>
    %56 = tpu.matmul %55, %53, %cst_37 {dimension_numbers = #tpu.dot_dimension_numbers<[1], [0], [0], [1], [0, 0, 1, 1], [], []>} : vector<24x8xf32>, vector<8x16xf32>, vector<24x16xf32> -> vector<24x16xf32>
    %57 = vector.extract_strided_slice %56 {offsets = [0, 0], sizes = [8, 16], strides = [1, 1]} : vector<24x16xf32> to vector<8x16xf32>
    %cst_38 = arith.constant dense<0.000000e+00> : vector<8x16xf32>
    %58 = tpu.matmul %57, %5, %cst_38 {dimension_numbers = #tpu.dot_dimension_numbers<[1], [0], [0], [1], [0, 0, 1, 1], [], []>} : vector<8x16xf32>, vector<16x16xf32>, vector<8x16xf32> -> vector<8x16xf32>
    %59 = vector.extract_strided_slice %56 {offsets = [8, 0], sizes = [8, 16], strides = [1, 1]} : vector<24x16xf32> to vector<8x16xf32>
    %60 = arith.addf %58, %59 : vector<8x16xf32>
    %61 = vector.extract_strided_slice %56 {offsets = [16, 0], sizes = [8, 16], strides = [1, 1]} : vector<24x16xf32> to vector<8x16xf32>
    %cst_39 = arith.constant dense<0.000000e+00> : vector<8x16xf32>
    %62 = tpu.matmul %61, %7, %cst_39 {dimension_numbers = #tpu.dot_dimension_numbers<[1], [0], [0], [1], [0, 0, 1, 1], [], []>} : vector<8x16xf32>, vector<16x16xf32>, vector<8x16xf32> -> vector<8x16xf32>
    %63 = arith.addf %60, %62 : vector<8x16xf32>
    %c0_40 = arith.constant 0 : index
    %c3_41 = arith.constant 3 : index
    %64 = vector.load %arg8[%c0_40, %c3_41] : memref<8x4xf32, #tpu.memory_space<vmem>>, vector<8x1xf32>
    %65 = vector.broadcast %64 : vector<8x1xf32> to vector<8x16xf32>
    %66 = arith.addf %63, %65 : vector<8x16xf32>
    %67 = arith.addf %66, %38 : vector<8x16xf32>
    %cst_42 = arith.constant 0.000000e+00 : f32
    %68 = vector.broadcast %cst_42 : f32 to vector<8x16xf32>
    %69 = arith.maximumf %67, %68 : vector<8x16xf32>
    %70 = arith.mulf %1, %1 : vector<8x256xf32>
    %c0_43 = arith.constant 0 : index
    %c0_44 = arith.constant 0 : index
    %71 = vector.load %arg3[%c0_43, %c0_44] : memref<256x16xf32, #tpu.memory_space<vmem>>, vector<256x16xf32>
    %cst_45 = arith.constant dense<0.000000e+00> : vector<8x16xf32>
    %72 = tpu.matmul %70, %71, %cst_45 {dimension_numbers = #tpu.dot_dimension_numbers<[1], [0], [0], [1], [0, 0, 1, 1], [], []>} : vector<8x256xf32>, vector<256x16xf32>, vector<8x16xf32> -> vector<8x16xf32>
    %cst_46 = arith.constant -8.500000e-01 : f32
    %73 = vector.broadcast %cst_46 : f32 to vector<8x16xf32>
    %74 = arith.mulf %72, %73 : vector<8x16xf32>
    %75 = math.exp %74 : vector<8x16xf32>
    %cst_47 = arith.constant 6.28318548 : f32
    %76 = vector.broadcast %cst_47 : f32 to vector<8x16xf32>
    %77 = arith.mulf %76, %75 : vector<8x16xf32>
    %c0_48 = arith.constant 0 : index
    %c0_49 = arith.constant 0 : index
    %78 = vector.load %arg4[%c0_48, %c0_49] : memref<16x256xf32, #tpu.memory_space<vmem>>, vector<16x256xf32>
    %cst_50 = arith.constant dense<0.000000e+00> : vector<8x256xf32>
    %79 = tpu.matmul %69, %78, %cst_50 {dimension_numbers = #tpu.dot_dimension_numbers<[1], [0], [0], [1], [0, 0, 1, 1], [], []>} : vector<8x16xf32>, vector<16x256xf32>, vector<8x256xf32> -> vector<8x256xf32>
    %c0_51 = arith.constant 0 : index
    %c0_52 = arith.constant 0 : index
    %80 = vector.load %arg5[%c0_51, %c0_52] : memref<16x256xf32, #tpu.memory_space<vmem>>, vector<16x256xf32>
    %cst_53 = arith.constant dense<0.000000e+00> : vector<8x256xf32>
    %81 = tpu.matmul %77, %80, %cst_53 {dimension_numbers = #tpu.dot_dimension_numbers<[1], [0], [0], [1], [0, 0, 1, 1], [], []>} : vector<8x16xf32>, vector<16x256xf32>, vector<8x256xf32> -> vector<8x256xf32>
    %82 = arith.mulf %79, %81 : vector<8x256xf32>
    %83 = math.tanh %82 : vector<8x256xf32>
    %cst_54 = arith.constant dense<0xFF800000> : vector<8xf32>
    %84 = vector.multi_reduction <maximumf>, %83, %cst_54 [1] : vector<8x256xf32> to vector<8xf32>
    %85 = vector.shape_cast %84 : vector<8xf32> to vector<8x1xf32>
    %cst_55 = arith.constant dense<0.000000e+00> : vector<8xf32>
    %86 = vector.multi_reduction <add>, %83, %cst_55 [1] : vector<8x256xf32> to vector<8xf32>
    %87 = vector.shape_cast %86 : vector<8xf32> to vector<8x1xf32>
    %cst_56 = arith.constant 2.560000e+02 : f32
    %88 = vector.broadcast %cst_56 : f32 to vector<8x1xf32>
    %89 = arith.divf %87, %88 : vector<8x1xf32>
    %90 = tpu.concatenate %85, %89 in 1 : vector<8x1xf32>, vector<8x1xf32> -> vector<8x2xf32>
    %c0_57 = arith.constant 0 : index
    %c0_58 = arith.constant 0 : index
    %91 = vector.load %arg9[%c0_57, %c0_58] : memref<2x8xf32, #tpu.memory_space<vmem>>, vector<2x8xf32>
    %cst_59 = arith.constant dense<0.000000e+00> : vector<2x2xf32>
    %92 = tpu.matmul %91, %90, %cst_59 {dimension_numbers = #tpu.dot_dimension_numbers<[1], [0], [0], [1], [0, 0, 1, 1], [], []>} : vector<2x8xf32>, vector<8x2xf32>, vector<2x2xf32> -> vector<2x2xf32>
    %cst_60 = arith.constant 0.000000e+00 : f32
    %93 = vector.broadcast %cst_60 : f32 to vector<2x2xf32>
    %94 = arith.maximumf %92, %93 : vector<2x2xf32>
    %c0_61 = arith.constant 0 : index
    %c0_62 = arith.constant 0 : index
    %95 = vector.load %arg10[%c0_61, %c0_62] : memref<8x2xf32, #tpu.memory_space<vmem>>, vector<8x2xf32>
    %cst_63 = arith.constant dense<0.000000e+00> : vector<8x2xf32>
    %96 = tpu.matmul %95, %94, %cst_63 {dimension_numbers = #tpu.dot_dimension_numbers<[1], [0], [0], [1], [0, 0, 1, 1], [], []>} : vector<8x2xf32>, vector<2x2xf32>, vector<8x2xf32> -> vector<8x2xf32>
    %97 = vector.extract_strided_slice %96 {offsets = [0, 0], sizes = [8, 1], strides = [1, 1]} : vector<8x2xf32> to vector<8x1xf32>
    %98 = vector.extract_strided_slice %96 {offsets = [0, 1], sizes = [8, 1], strides = [1, 1]} : vector<8x2xf32> to vector<8x1xf32>
    %99 = arith.addf %97, %98 : vector<8x1xf32>
    %100 = arith.negf %99 : vector<8x1xf32>
    %101 = math.exp %100 : vector<8x1xf32>
    %cst_64 = arith.constant 1.000000e+00 : f32
    %102 = vector.broadcast %cst_64 : f32 to vector<8x1xf32>
    %103 = arith.addf %102, %101 : vector<8x1xf32>
    %104 = arith.divf %102, %103 : vector<8x1xf32>
    %105 = vector.broadcast %104 : vector<8x1xf32> to vector<8x256xf32>
    %106 = arith.mulf %83, %105 : vector<8x256xf32>
    %cst_65 = arith.constant dense<0xFF800000> : vector<256xf32>
    %107 = vector.multi_reduction <maximumf>, %106, %cst_65 [0] : vector<8x256xf32> to vector<256xf32>
    %108 = vector.shape_cast %107 : vector<256xf32> to vector<1x256xf32>
    %cst_66 = arith.constant dense<0.000000e+00> : vector<256xf32>
    %109 = vector.multi_reduction <add>, %106, %cst_66 [0] : vector<8x256xf32> to vector<256xf32>
    %110 = vector.shape_cast %109 : vector<256xf32> to vector<1x256xf32>
    %cst_67 = arith.constant 8.000000e+00 : f32
    %111 = vector.broadcast %cst_67 : f32 to vector<1x256xf32>
    %112 = arith.divf %110, %111 : vector<1x256xf32>
    %c0_68 = arith.constant 0 : index
    %c0_69 = arith.constant 0 : index
    %c0_70 = arith.constant 0 : index
    %113 = vector.load %arg11[%c0_68, %c0_69, %c0_70] : memref<2x256x256xf32, #tpu.memory_space<vmem>>, vector<1x256x256xf32>
    %114 = vector.shape_cast %113 : vector<1x256x256xf32> to vector<256x256xf32>
    %cst_71 = arith.constant dense<0.000000e+00> : vector<1x256xf32>
    %115 = tpu.matmul %108, %114, %cst_71 {dimension_numbers = #tpu.dot_dimension_numbers<[1], [0], [0], [1], [0, 0, 1, 1], [], []>} : vector<1x256xf32>, vector<256x256xf32>, vector<1x256xf32> -> vector<1x256xf32>
    %c1_72 = arith.constant 1 : index
    %c0_73 = arith.constant 0 : index
    %c0_74 = arith.constant 0 : index
    %116 = vector.load %arg11[%c1_72, %c0_73, %c0_74] : memref<2x256x256xf32, #tpu.memory_space<vmem>>, vector<1x256x256xf32>
    %117 = vector.shape_cast %116 : vector<1x256x256xf32> to vector<256x256xf32>
    %cst_75 = arith.constant dense<0.000000e+00> : vector<1x256xf32>
    %118 = tpu.matmul %112, %117, %cst_75 {dimension_numbers = #tpu.dot_dimension_numbers<[1], [0], [0], [1], [0, 0, 1, 1], [], []>} : vector<1x256xf32>, vector<256x256xf32>, vector<1x256xf32> -> vector<1x256xf32>
    %119 = arith.addf %115, %118 : vector<1x256xf32>
    %120 = arith.negf %119 : vector<1x256xf32>
    %121 = math.exp %120 : vector<1x256xf32>
    %cst_76 = arith.constant 1.000000e+00 : f32
    %122 = vector.broadcast %cst_76 : f32 to vector<1x256xf32>
    %123 = arith.addf %122, %121 : vector<1x256xf32>
    %124 = arith.divf %122, %123 : vector<1x256xf32>
    %125 = vector.broadcast %124 : vector<1x256xf32> to vector<8x256xf32>
    %126 = arith.mulf %106, %125 : vector<8x256xf32>
    %127 = arith.mulf %126, %1 : vector<8x256xf32>
    %c0_77 = arith.constant 0 : index
    %c0_78 = arith.constant 0 : index
    %c0_79 = arith.constant 0 : index
    %128 = vector.load %arg12[%c0_77, %c0_78, %c0_79] : memref<1x8x256xf32, #tpu.memory_space<vmem>>, vector<1x8x256xf32>
    %129 = vector.shape_cast %128 : vector<1x8x256xf32> to vector<8x256xf32>
    %130 = vector.shape_cast %127 : vector<8x256xf32> to vector<1x8x256xf32>
    tpu.vector_store %arg12[%c0_77, %c0_78, %c0_79], %130 {strides = array<i32>} : memref<1x8x256xf32, #tpu.memory_space<vmem>>, vector<1x8x256xf32>,
    return
  }
  func.func @transform_0(%arg0: i32) -> (i32, i32, i32) {
    %c0_i32 = arith.constant 0 : i32
    %c0_i32_0 = arith.constant 0 : i32
    %c0_i32_1 = arith.constant 0 : i32
    return %arg0, %c0_i32, %c0_i32_0 : i32, i32, i32
  }
  func.func @transform_1(%arg0: i32) -> (i32, i32) {
    %c0_i32 = arith.constant 0 : i32
    %c0_i32_0 = arith.constant 0 : i32
    %c0_i32_1 = arith.constant 0 : i32
    return %c0_i32, %c0_i32_0 : i32, i32
  }
  func.func @transform_2(%arg0: i32) -> (i32, i32) {
    %c0_i32 = arith.constant 0 : i32
    %c0_i32_0 = arith.constant 0 : i32
    %c0_i32_1 = arith.constant 0 : i32
    return %c0_i32, %c0_i32_0 : i32, i32
  }
  func.func @transform_3(%arg0: i32) -> (i32, i32) {
    %c0_i32 = arith.constant 0 : i32
    %c0_i32_0 = arith.constant 0 : i32
    %c0_i32_1 = arith.constant 0 : i32
    return %c0_i32, %c0_i32_0 : i32, i32
  }
  func.func @transform_4(%arg0: i32) -> (i32, i32) {
    %c0_i32 = arith.constant 0 : i32
    %c0_i32_0 = arith.constant 0 : i32
    %c0_i32_1 = arith.constant 0 : i32
    return %c0_i32, %c0_i32_0 : i32, i32
  }
  func.func @transform_5(%arg0: i32) -> (i32, i32, i32) {
    %c0_i32 = arith.constant 0 : i32
    %c0_i32_0 = arith.constant 0 : i32
    %c0_i32_1 = arith.constant 0 : i32
    %c0_i32_2 = arith.constant 0 : i32
    return %c0_i32, %c0_i32_0, %c0_i32_1 : i32, i32, i32
  }
  func.func @transform_6(%arg0: i32) -> (i32, i32, i32) {
    %c0_i32 = arith.constant 0 : i32
    %c0_i32_0 = arith.constant 0 : i32
    %c0_i32_1 = arith.constant 0 : i32
    %c0_i32_2 = arith.constant 0 : i32
    return %c0_i32, %c0_i32_0, %c0_i32_1 : i32, i32, i32
  }
  func.func @transform_7(%arg0: i32) -> (i32, i32) {
    %c0_i32 = arith.constant 0 : i32
    %c0_i32_0 = arith.constant 0 : i32
    %c0_i32_1 = arith.constant 0 : i32
    return %c0_i32, %c0_i32_0 : i32, i32
  }
  func.func @transform_8(%arg0: i32) -> (i32, i32) {
    %c0_i32 = arith.constant 0 : i32
    %c0_i32_0 = arith.constant 0 : i32
    %c0_i32_1 = arith.constant 0 : i32
    return %c0_i32, %c0_i32_0 : i32, i32
  }
  func.func @transform_9(%arg0: i32) -> (i32, i32) {
    %c0_i32 = arith.constant 0 : i32
    %c0_i32_0 = arith.constant 0 : i32
    %c0_i32_1 = arith.constant 0 : i32
    return %c0_i32, %c0_i32_0 : i32, i32
  }
  func.func @transform_10(%arg0: i32) -> (i32, i32, i32) {
    %c0_i32 = arith.constant 0 : i32
    %c0_i32_0 = arith.constant 0 : i32
    %c0_i32_1 = arith.constant 0 : i32
    %c0_i32_2 = arith.constant 0 : i32
    return %c0_i32, %c0_i32_0, %c0_i32_1 : i32, i32, i32
  }
  func.func @transform_11(%arg0: i32) -> (i32, i32, i32) {
    %c0_i32 = arith.constant 0 : i32
    %c0_i32_0 = arith.constant 0 : i32
    %c0_i32_1 = arith.constant 0 : i32
    return %arg0, %c0_i32, %c0_i32_0 : i32, i32, i32
  }
}

</mosaic_0001>

<llo_original>
// kernel: tpu_custom_call.1
$region0: #{tpu_custom_call.1}
  #allocation0 [shape = 'u32[]', space=smem, size = 0x4, offset = 0x4, fixed_abs, tag = 'smem constant byte address 0x4 - core index']
  #allocation1 [shape = 'u32[144,128]{1,0:T(1,128)}', space=vmem, size = 0x12000, scoped, tag = 'internal scratch']
  %s0 = inlined_call_operand.vmem [shape: f32[2,8,256], index: 0, kind: input, shape index: {}]
  %s1 = inlined_call_operand.vmem [shape: f32[256,16], index: 1, kind: input, shape index: {}]
  %s2 = inlined_call_operand.vmem [shape: f32[256,16], index: 2, kind: input, shape index: {}]
  %s3 = inlined_call_operand.vmem [shape: f32[16,256], index: 3, kind: input, shape index: {}]
  %s4 = inlined_call_operand.vmem [shape: f32[16,256], index: 4, kind: input, shape index: {}]
  %s5 = inlined_call_operand.vmem [shape: f32[2,16,16], index: 5, kind: input, shape index: {}]
  %s6 = inlined_call_operand.vmem [shape: f32[4,24,8], index: 6, kind: input, shape index: {}]
  %s7 = inlined_call_operand.vmem [shape: f32[8,4], index: 7, kind: input, shape index: {}]
  %s8 = inlined_call_operand.vmem [shape: f32[2,8], index: 8, kind: input, shape index: {}]
  %s9 = inlined_call_operand.vmem [shape: f32[8,2], index: 9, kind: input, shape index: {}]
  %s10 = inlined_call_operand.hbm [shape: f32[2,256,256], index: 10, kind: input, shape index: {}]
  %s11 = inlined_call_operand.hbm [shape: f32[2,8,256], index: 11, kind: output, shape index: {}]
  %s12 = sld [smem:[#allocation0]]
  $region81: #{tpu_custom_call.1} parent=0
    _
  %s14 = ssub.s32 1, %s12
  %s15 = scalar_select 0, %s14, %s12
  $region1: #{tpu_custom_call.1} parent=0
    #allocation2 [shape = 'u8[524288]{0}', space=vmem, size = 0x80000, scoped, tag = 'input window, operand 10, single buffered']
    #allocation3 [shape = 's32[2]{0}', space=sflag, size = 0x8, scoped, tag = 'scoped memory for tpu_custom_call.1']
    #allocation4 [shape = 's32[2]{0}', space=sflag, size = 0x8, scoped, tag = 'scoped memory for tpu_custom_call.1']
    #allocation5 [shape = 'u8[16384]{0}', space=vmem, size = 0x4000, scoped, tag = 'output window, operand 0']
    %16 = vsyncpa [#allocation3], 0
    %17 = vsyncpa [#allocation4], 0
    %s18 = scalar_lea.sflag [#allocation4], 1
    %19 = vsyncpa %s18, 0
    loop: start=0, step=1, limit=4
    $region2: #{tpu_custom_call.1} parent=1 // loop_pre_header
      _
    $region3: #{tpu_custom_call.1} parent=1 // loop_header
      %s21 = sphi 0, %s25
      %p22 = scmp.ge.s32.totalorder %s21, 4
      %s31 = sphi 0, %s33
      %s34 = sphi 0, %s31
      %s35 = sphi 0, %s34
      %s51 = sphi 0, %s35
      %s55 = sphi 0, %s55
      %s57 = sphi 0, %s55
      %s58 = sphi 0, %s57
      %s72 = sphi 0, %s58
      %s76 = sphi 0, %s76
      %s78 = sphi 0, %s76
      %s79 = sphi 0, %s78
      %s93 = sphi 0, %s79
      %s97 = sphi 0, %s97
      %s99 = sphi 0, %s97
      %s100 = sphi 0, %s99
      %s114 = sphi 0, %s100
      %s118 = sphi 0, %s118
      %s120 = sphi 0, %s118
      %s121 = sphi 0, %s120
      %s135 = sphi 0, %s121
      %s139 = sphi 0, %s139
      %s141 = sphi 0, %s139
      %s142 = sphi 0, %s141
      %s156 = sphi 0, %s142
      %s160 = sphi 0, %s160
      %s162 = sphi 0, %s160
      %s163 = sphi 0, %s162
      %s177 = sphi 0, %s163
      %s181 = sphi 0, %s181
      %s183 = sphi 0, %s181
      %s184 = sphi 0, %s183
      %s198 = sphi 0, %s184
      %s202 = sphi 0, %s202
      %s204 = sphi 0, %s202
      %s205 = sphi 0, %s204
      %s219 = sphi 0, %s205
      %s223 = sphi 0, %s223
      %s225 = sphi 0, %s223
      %s226 = sphi 0, %s225
      %s240 = sphi 0, %s226
      %s244 = sphi 0, %s244
      %s246 = sphi 0, %s244
      %s247 = sphi 0, %s246
      %s261 = sphi 0, %s247
      %s267 = sphi 0, %s269
      %s270 = sphi 0, %s267
      %s271 = sphi 0, %s270
      %s287 = sphi 0, %s271
    $region4: #{tpu_custom_call.1} parent=1 // loop_header_branch
      %24 = sbr.rel (%p22) target = $region8
    $region5: #{tpu_custom_call.1} parent=1 // loop_body
      %s26 = ssub.s32 %s21, 1
      %s27 = ssub.s32 %s21, 2
      %s28 = sadd.s32 %s21, 1
      %s29 = ssub.s32 %s21, %s28
      %p30 = scmp.eq.s32.totalorder %s29, 0
      %s32 = sadd.s32 %s31, 1
      %s33 = scalar_select %p30, %s31, %s32
      %p36 = pneg %p30
      %p37 = scmp.eq.s32.totalorder %s21, 1
      %p38 = por %p36, %p37
      %p39 = scmp.ne.s32.totalorder %s31, %s34
      %p40 = scmp.eq.s32.totalorder %s21, 0
      %p41 = por %p39, %p40
      %p42 = scmp.ne.s32.totalorder %s31, %s34
      %p43 = scmp.eq.s32.totalorder %s26, 1
      %p44 = por %p42, %p43
      %p45 = scmp.ne.s32.totalorder %s34, %s35
      %p46 = scmp.eq.s32.totalorder %s26, 0
      %p47 = por %p45, %p46
      %p48 = scmp.ne.s32.totalorder %s34, %s35
      %p49 = scmp.eq.s32.totalorder %s27, 1
      %p50 = por %p48, %p49
      %p52 = scmp.ne.s32.totalorder %s35, %s51
      %p53 = scmp.eq.s32.totalorder %s27, 0
      %p54 = por %p52, %p53
      %s56 = sadd.s32 %s55, 1
      %p59 = scmp.eq.s32.totalorder %s21, 1
      %p60 = scmp.ne.s32.totalorder %s55, %s57
      %p61 = scmp.eq.s32.totalorder %s21, 0
      %p62 = por %p60, %p61
      %p63 = scmp.ne.s32.totalorder %s55, %s57
      %p64 = scmp.eq.s32.totalorder %s26, 1
      %p65 = por %p63, %p64
      %p66 = scmp.ne.s32.totalorder %s57, %s58
      %p67 = scmp.eq.s32.totalorder %s26, 0
      %p68 = por %p66, %p67
      %p69 = scmp.ne.s32.totalorder %s57, %s58
      %p70 = scmp.eq.s32.totalorder %s27, 1
      %p71 = por %p69, %p70
      %p73 = scmp.ne.s32.totalorder %s58, %s72
      %p74 = scmp.eq.s32.totalorder %s27, 0
      %p75 = por %p73, %p74
      %s77 = sadd.s32 %s76, 1
      %p80 = scmp.eq.s32.totalorder %s21, 1
      %p81 = scmp.ne.s32.totalorder %s76, %s78
      %p82 = scmp.eq.s32.totalorder %s21, 0
      %p83 = por %p81, %p82
      %p84 = scmp.ne.s32.totalorder %s76, %s78
      %p85 = scmp.eq.s32.totalorder %s26, 1
      %p86 = por %p84, %p85
      %p87 = scmp.ne.s32.totalorder %s78, %s79
      %p88 = scmp.eq.s32.totalorder %s26, 0
      %p89 = por %p87, %p88
      %p90 = scmp.ne.s32.totalorder %s78, %s79
      %p91 = scmp.eq.s32.totalorder %s27, 1
      %p92 = por %p90, %p91
      %p94 = scmp.ne.s32.totalorder %s79, %s93
      %p95 = scmp.eq.s32.totalorder %s27, 0
      %p96 = por %p94, %p95
      %s98 = sadd.s32 %s97, 1
      %p101 = scmp.eq.s32.totalorder %s21, 1
      %p102 = scmp.ne.s32.totalorder %s97, %s99
      %p103 = scmp.eq.s32.totalorder %s21, 0
      %p104 = por %p102, %p103
      %p105 = scmp.ne.s32.totalorder %s97, %s99
      %p106 = scmp.eq.s32.totalorder %s26, 1
      %p107 = por %p105, %p106
      %p108 = scmp.ne.s32.totalorder %s99, %s100
      %p109 = scmp.eq.s32.totalorder %s26, 0
      %p110 = por %p108, %p109
      %p111 = scmp.ne.s32.totalorder %s99, %s100
      %p112 = scmp.eq.s32.totalorder %s27, 1
      %p113 = por %p111, %p112
      %p115 = scmp.ne.s32.totalorder %s100, %s114
      %p116 = scmp.eq.s32.totalorder %s27, 0
      %p117 = por %p115, %p116
      %s119 = sadd.s32 %s118, 1
      %p122 = scmp.eq.s32.totalorder %s21, 1
      %p123 = scmp.ne.s32.totalorder %s118, %s120
      %p124 = scmp.eq.s32.totalorder %s21, 0
      %p125 = por %p123, %p124
      %p126 = scmp.ne.s32.totalorder %s118, %s120
      %p127 = scmp.eq.s32.totalorder %s26, 1
      %p128 = por %p126, %p127
      %p129 = scmp.ne.s32.totalorder %s120, %s121
      %p130 = scmp.eq.s32.totalorder %s26, 0
      %p131 = por %p129, %p130
      %p132 = scmp.ne.s32.totalorder %s120, %s121
      %p133 = scmp.eq.s32.totalorder %s27, 1
      %p134 = por %p132, %p133
      %p136 = scmp.ne.s32.totalorder %s121, %s135
      %p137 = scmp.eq.s32.totalorder %s27, 0
      %p138 = por %p136, %p137
      %s140 = sadd.s32 %s139, 1
      %p143 = scmp.eq.s32.totalorder %s21, 1
      %p144 = scmp.ne.s32.totalorder %s139, %s141
      %p145 = scmp.eq.s32.totalorder %s21, 0
      %p146 = por %p144, %p145
      %p147 = scmp.ne.s32.totalorder %s139, %s141
      %p148 = scmp.eq.s32.totalorder %s26, 1
      %p149 = por %p147, %p148
      %p150 = scmp.ne.s32.totalorder %s141, %s142
      %p151 = scmp.eq.s32.totalorder %s26, 0
      %p152 = por %p150, %p151
      %p153 = scmp.ne.s32.totalorder %s141, %s142
      %p154 = scmp.eq.s32.totalorder %s27, 1
      %p155 = por %p153, %p154
      %p157 = scmp.ne.s32.totalorder %s142, %s156
      %p158 = scmp.eq.s32.totalorder %s27, 0
      %p159 = por %p157, %p158
      %s161 = sadd.s32 %s160, 1
      %p164 = scmp.eq.s32.totalorder %s21, 1
      %p165 = scmp.ne.s32.totalorder %s160, %s162
      %p166 = scmp.eq.s32.totalorder %s21, 0
      %p167 = por %p165, %p166
      %p168 = scmp.ne.s32.totalorder %s160, %s162
      %p169 = scmp.eq.s32.totalorder %s26, 1
      %p170 = por %p168, %p169
      %p171 = scmp.ne.s32.totalorder %s162, %s163
      %p172 = scmp.eq.s32.totalorder %s26, 0
      %p173 = por %p171, %p172
      %p174 = scmp.ne.s32.totalorder %s162, %s163
      %p175 = scmp.eq.s32.totalorder %s27, 1
      %p176 = por %p174, %p175
      %p178 = scmp.ne.s32.totalorder %s163, %s177
      %p179 = scmp.eq.s32.totalorder %s27, 0
      %p180 = por %p178, %p179
      %s182 = sadd.s32 %s181, 1
      %p185 = scmp.eq.s32.totalorder %s21, 1
      %p186 = scmp.ne.s32.totalorder %s181, %s183
      %p187 = scmp.eq.s32.totalorder %s21, 0
      %p188 = por %p186, %p187
      %p189 = scmp.ne.s32.totalorder %s181, %s183
      %p190 = scmp.eq.s32.totalorder %s26, 1
      %p191 = por %p189, %p190
      %p192 = scmp.ne.s32.totalorder %s183, %s184
      %p193 = scmp.eq.s32.totalorder %s26, 0
      %p194 = por %p192, %p193
      %p195 = scmp.ne.s32.totalorder %s183, %s184
      %p196 = scmp.eq.s32.totalorder %s27, 1
      %p197 = por %p195, %p196
      %p199 = scmp.ne.s32.totalorder %s184, %s198
      %p200 = scmp.eq.s32.totalorder %s27, 0
      %p201 = por %p199, %p200
      %s203 = sadd.s32 %s202, 1
      %p206 = scmp.eq.s32.totalorder %s21, 1
      %p207 = scmp.ne.s32.totalorder %s202, %s204
      %p208 = scmp.eq.s32.totalorder %s21, 0
      %p209 = por %p207, %p208
      %p210 = scmp.ne.s32.totalorder %s202, %s204
      %p211 = scmp.eq.s32.totalorder %s26, 1
      %p212 = por %p210, %p211
      %p213 = scmp.ne.s32.totalorder %s204, %s205
      %p214 = scmp.eq.s32.totalorder %s26, 0
      %p215 = por %p213, %p214
      %p216 = scmp.ne.s32.totalorder %s204, %s205
      %p217 = scmp.eq.s32.totalorder %s27, 1
      %p218 = por %p216, %p217
      %p220 = scmp.ne.s32.totalorder %s205, %s219
      %p221 = scmp.eq.s32.totalorder %s27, 0
      %p222 = por %p220, %p221
      %s224 = sadd.s32 %s223, 1
      %p227 = scmp.eq.s32.totalorder %s21, 1
      %p228 = scmp.ne.s32.totalorder %s223, %s225
      %p229 = scmp.eq.s32.totalorder %s21, 0
      %p230 = por %p228, %p229
      %p231 = scmp.ne.s32.totalorder %s223, %s225
      %p232 = scmp.eq.s32.totalorder %s26, 1
      %p233 = por %p231, %p232
      %p234 = scmp.ne.s32.totalorder %s225, %s226
      %p235 = scmp.eq.s32.totalorder %s26, 0
      %p236 = por %p234, %p235
      %p237 = scmp.ne.s32.totalorder %s225, %s226
      %p238 = scmp.eq.s32.totalorder %s27, 1
      %p239 = por %p237, %p238
      %p241 = scmp.ne.s32.totalorder %s226, %s240
      %p242 = scmp.eq.s32.totalorder %s27, 0
      %p243 = por %p241, %p242
      %s245 = sadd.s32 %s244, 1
      %p248 = scmp.eq.s32.totalorder %s21, 1
      %p249 = scmp.ne.s32.totalorder %s244, %s246
      %p250 = scmp.eq.s32.totalorder %s21, 0
      %p251 = por %p249, %p250
      %p252 = scmp.ne.s32.totalorder %s244, %s246
      %p253 = scmp.eq.s32.totalorder %s26, 1
      %p254 = por %p252, %p253
      %p255 = scmp.ne.s32.totalorder %s246, %s247
      %p256 = scmp.eq.s32.totalorder %s26, 0
      %p257 = por %p255, %p256
      %p258 = scmp.ne.s32.totalorder %s246, %s247
      %p259 = scmp.eq.s32.totalorder %s27, 1
      %p260 = por %p258, %p259
      %p262 = scmp.ne.s32.totalorder %s247, %s261
      %p263 = scmp.eq.s32.totalorder %s27, 0
      %p264 = por %p262, %p263
      %s265 = ssub.s32 %s21, %s28
      %p266 = scmp.eq.s32.totalorder %s265, 0
      %s268 = sadd.s32 %s267, 1
      %s269 = scalar_select %p266, %s267, %s268
      %p272 = pneg %p266
      %p273 = scmp.eq.s32.totalorder %s21, 1
      %p274 = por %p272, %p273
      %p275 = scmp.ne.s32.totalorder %s267, %s270
      %p276 = scmp.eq.s32.totalorder %s21, 0
      %p277 = por %p275, %p276
      %p278 = scmp.ne.s32.totalorder %s267, %s270
      %p279 = scmp.eq.s32.totalorder %s26, 1
      %p280 = por %p278, %p279
      %p281 = scmp.ne.s32.totalorder %s270, %s271
      %p282 = scmp.eq.s32.totalorder %s26, 0
      %p283 = por %p281, %p282
      %p284 = scmp.ne.s32.totalorder %s270, %s271
      %p285 = scmp.eq.s32.totalorder %s27, 1
      %p286 = por %p284, %p285
      %p288 = scmp.ne.s32.totalorder %s271, %s287
      %p289 = scmp.eq.s32.totalorder %s27, 0
      %p290 = por %p288, %p289
      %p291 = scmp.le.s32.totalorder 1, %s21
      %p292 = scmp.lt.s32.totalorder %s21, 3
      %p293 = pnand %p291, %p292
      %p294 = pneg %p293
      // Predicated region
      $region9: #{tpu_custom_call.1} parent=5 // pred_check
        _
      $region10: #{tpu_custom_call.1} parent=5 // pred_check_branch
        %296 = sbr.rel (%p293) target = $region12
      $region11: #{tpu_custom_call.1} parent=5 // pred_region
        %s297 = ssub.s32 %s21, 1
        // Predicated region
        $region13: #{tpu_custom_call.1} parent=11 // pred_check
          %p298 = pneg %p68
        $region14: #{tpu_custom_call.1} parent=11 // pred_check_branch
          %300 = sbr.rel (%p298) target = $region16
        $region15: #{tpu_custom_call.1} parent=11 // pred_region
          _
        $region16: #{tpu_custom_call.1} parent=11 // pred_fallthru
          _
        // Predicated region
        $region17: #{tpu_custom_call.1} parent=11 // pred_check
          %p301 = pneg %p89
        $region18: #{tpu_custom_call.1} parent=11 // pred_check_branch
          %303 = sbr.rel (%p301) target = $region20
        $region19: #{tpu_custom_call.1} parent=11 // pred_region
          _
        $region20: #{tpu_custom_call.1} parent=11 // pred_fallthru
          _
        // Predicated region
        $region21: #{tpu_custom_call.1} parent=11 // pred_check
          %p304 = pneg %p110
        $region22: #{tpu_custom_call.1} parent=11 // pred_check_branch
          %306 = sbr.rel (%p304) target = $region24
        $region23: #{tpu_custom_call.1} parent=11 // pred_region
          _
        $region24: #{tpu_custom_call.1} parent=11 // pred_fallthru
          _
        // Predicated region
        $region25: #{tpu_custom_call.1} parent=11 // pred_check
          %p307 = pneg %p131
        $region26: #{tpu_custom_call.1} parent=11 // pred_check_branch
          %309 = sbr.rel (%p307) target = $region28
        $region27: #{tpu_custom_call.1} parent=11 // pred_region
          _
        $region28: #{tpu_custom_call.1} parent=11 // pred_fallthru
          _
        // Predicated region
        $region29: #{tpu_custom_call.1} parent=11 // pred_check
          %p310 = pneg %p152
        $region30: #{tpu_custom_call.1} parent=11 // pred_check_branch
          %312 = sbr.rel (%p310) target = $region32
        $region31: #{tpu_custom_call.1} parent=11 // pred_region
          _
        $region32: #{tpu_custom_call.1} parent=11 // pred_fallthru
          _
        // Predicated region
        $region33: #{tpu_custom_call.1} parent=11 // pred_check
          %p313 = pneg %p173
        $region34: #{tpu_custom_call.1} parent=11 // pred_check_branch
          %315 = sbr.rel (%p313) target = $region36
        $region35: #{tpu_custom_call.1} parent=11 // pred_region
          _
        $region36: #{tpu_custom_call.1} parent=11 // pred_fallthru
          _
        // Predicated region
        $region37: #{tpu_custom_call.1} parent=11 // pred_check
          %p316 = pneg %p194
        $region38: #{tpu_custom_call.1} parent=11 // pred_check_branch
          %318 = sbr.rel (%p316) target = $region40
        $region39: #{tpu_custom_call.1} parent=11 // pred_region
          _
        $region40: #{tpu_custom_call.1} parent=11 // pred_fallthru
          _
        // Predicated region
        $region41: #{tpu_custom_call.1} parent=11 // pred_check
          %p319 = pneg %p215
        $region42: #{tpu_custom_call.1} parent=11 // pred_check_branch
          %321 = sbr.rel (%p319) target = $region44
        $region43: #{tpu_custom_call.1} parent=11 // pred_region
          _
        $region44: #{tpu_custom_call.1} parent=11 // pred_fallthru
          _
        // Predicated region
        $region45: #{tpu_custom_call.1} parent=11 // pred_check
          %p322 = pneg %p236
        $region46: #{tpu_custom_call.1} parent=11 // pred_check_branch
          %324 = sbr.rel (%p322) target = $region48
        $region47: #{tpu_custom_call.1} parent=11 // pred_region
          _
        $region48: #{tpu_custom_call.1} parent=11 // pred_fallthru
          _
        // Predicated region
        $region49: #{tpu_custom_call.1} parent=11 // pred_check
          %p325 = pneg %p257
        $region50: #{tpu_custom_call.1} parent=11 // pred_check_branch
          %327 = sbr.rel (%p325) target = $region52
        $region51: #{tpu_custom_call.1} parent=11 // pred_region
          %s329 = ssub.s32 16384, 16384
          %330 = vsyncadd [#allocation3], %s329
          %s331 = sshll.u32 [#allocation2], 4
          %s332 = int_to_ptr.vmem [resolvable:$true] %s331
          %337 = dma.hbm_to_vmem [thread:$0]  %s10, 16384, %s332, [#allocation3], 256, 256, 16
        $region52: #{tpu_custom_call.1} parent=11 // pred_fallthru
          _
      $region12: #{tpu_custom_call.1} parent=5 // pred_fallthru
        _
      %p338 = scmp.lt.s32.totalorder %s21, 2
      // Predicated region
      $region53: #{tpu_custom_call.1} parent=5 // pred_check
        %p339 = pneg %p338
      $region54: #{tpu_custom_call.1} parent=5 // pred_check_branch
        %341 = sbr.rel (%p339) target = $region56
      $region55: #{tpu_custom_call.1} parent=5 // pred_region
        // Predicated region
        $region57: #{tpu_custom_call.1} parent=55 // pred_check
          %p342 = pneg %p41
        $region58: #{tpu_custom_call.1} parent=55 // pred_check_branch
          %344 = sbr.rel (%p342) target = $region60
        $region59: #{tpu_custom_call.1} parent=55 // pred_region
          %p345 = scmp.lt.s32.totalorder %s21, 1
          %s346 = scalar_select %p345, %s21, 1
          %s347 = smul.addr %s346, 2
          %s348 = smul.addr %s347, 8
          %s349 = scalar_lea.vmem %s0, %s348
        $region60: #{tpu_custom_call.1} parent=55 // pred_fallthru
          _
      $region56: #{tpu_custom_call.1} parent=5 // pred_fallthru
        _
      %p350 = scmp.le.s32.totalorder 1, %s21
      %p351 = scmp.lt.s32.totalorder %s21, 3
      %p352 = pnand %p350, %p351
      %p353 = pneg %p352
      // Predicated region
      $region61: #{tpu_custom_call.1} parent=5 // pred_check
        _
      $region62: #{tpu_custom_call.1} parent=5 // pred_check_branch
        %355 = sbr.rel (%p352) target = $region64
      $region63: #{tpu_custom_call.1} parent=5 // pred_region
        %s356 = ssub.s32 %s21, 1
        // Predicated region
        $region65: #{tpu_custom_call.1} parent=63 // pred_check
          %p357 = pneg %p257
        $region66: #{tpu_custom_call.1} parent=63 // pred_check_branch
          %359 = sbr.rel (%p357) target = $region68
        $region67: #{tpu_custom_call.1} parent=63 // pred_region
          %360 = dma.done [#allocation3], 16384
        $region68: #{tpu_custom_call.1} parent=63 // pred_fallthru
          _
        %p361 = scmp.lt.s32.totalorder %s26, 1
        %s362 = scalar_select %p361, %s26, 1
        %s363 = smul.addr %s362, 2
        %s364 = smul.addr %s363, 8
        %s365 = scalar_lea.vmem %s0, %s364
        %p366 = pneg %p47
        %p367 = pneg %p44
        %p368 = pneg %p68
        %p369 = pneg %p65
        %p370 = pneg %p89
        %p371 = pneg %p86
        %p372 = pneg %p110
        %p373 = pneg %p107
        %p374 = pneg %p131
        %p375 = pneg %p128
        %p376 = pneg %p152
        %p377 = pneg %p149
        %p378 = pneg %p173
        %p379 = pneg %p170
        %p380 = pneg %p194
        %p381 = pneg %p191
        %p382 = pneg %p215
        %p383 = pneg %p212
        %p384 = pneg %p236
        %p385 = pneg %p233
        %p386 = pneg %p257
        %p387 = pneg %p254
        %p388 = pneg %p283
        %p389 = pneg %p280
        %s390 = sand.u32 %s270, 1
        %s391 = scalar_lea.sflag [#allocation4], %s390
        %s392 = sand.u32 %s270, 1
        %s393 = smul.addr %s392, 16
        %s394 = scalar_lea.vmem [#allocation5], %s393
        %p395 = scmp.lt.s32.totalorder %s26, 1
        %s396 = scalar_select %p395, %s26, 1
        %s397 = smul.addr %s396, 2
        %s398 = smul.addr %s397, 8
        %s399 = scalar_lea.vmem %s0, %s398
        %v400 = vld [vmem:[%s399] sm:$0xff]
        %v401 = vld [vmem:[%s399 + $0x8] sm:$0xff]
        %v402 = vld [vmem:[%s1] sm:$0xff]
        %v403 = vld [vmem:[%s1 + $0x8] sm:$0xff]
        %v404 = vld [vmem:[%s1 + $0x10] sm:$0xff]
        %v405 = vld [vmem:[%s1 + $0x18] sm:$0xff]
        %v406 = vld [vmem:[%s1 + $0x20] sm:$0xff]
        %v407 = vld [vmem:[%s1 + $0x28] sm:$0xff]
        %v408 = vld [vmem:[%s1 + $0x30] sm:$0xff]
        %v409 = vld [vmem:[%s1 + $0x38] sm:$0xff]
        %v410 = vld [vmem:[%s1 + $0x40] sm:$0xff]
        %v411 = vld [vmem:[%s1 + $0x48] sm:$0xff]
        %v412 = vld [vmem:[%s1 + $0x50] sm:$0xff]
        %v413 = vld [vmem:[%s1 + $0x58] sm:$0xff]
        %v414 = vld [vmem:[%s1 + $0x60] sm:$0xff]
        %v415 = vld [vmem:[%s1 + $0x68] sm:$0xff]
        %v416 = vld [vmem:[%s1 + $0x70] sm:$0xff]
        %v417 = vld [vmem:[%s1 + $0x78] sm:$0xff]
        %v418 = vld [vmem:[%s1 + $0x80] sm:$0xff]
        %v419 = vld [vmem:[%s1 + $0x88] sm:$0xff]
        %v420 = vld [vmem:[%s1 + $0x90] sm:$0xff]
        %v421 = vld [vmem:[%s1 + $0x98] sm:$0xff]
        %v422 = vld [vmem:[%s1 + $0xa0] sm:$0xff]
        %v423 = vld [vmem:[%s1 + $0xa8] sm:$0xff]
        %v424 = vld [vmem:[%s1 + $0xb0] sm:$0xff]
        %v425 = vld [vmem:[%s1 + $0xb8] sm:$0xff]
        %v426 = vld [vmem:[%s1 + $0xc0] sm:$0xff]
        %v427 = vld [vmem:[%s1 + $0xc8] sm:$0xff]
        %v428 = vld [vmem:[%s1 + $0xd0] sm:$0xff]
        %v429 = vld [vmem:[%s1 + $0xd8] sm:$0xff]
        %v430 = vld [vmem:[%s1 + $0xe0] sm:$0xff]
        %v431 = vld [vmem:[%s1 + $0xe8] sm:$0xff]
        %v432 = vld [vmem:[%s1 + $0xf0] sm:$0xff]
        %v433 = vld [vmem:[%s1 + $0xf8] sm:$0xff]
        %434 = vmatprep.subr.mxu0 0.0
        %435 = vmatpush1.msra.mxu0 %v402
        %436 = vmatprep.subr.mxu0 0.0
        %437 = vmatpush1.msra.mxu0 %v403
        %438 = vmatprep.subr.mxu0 0.0
        %439 = vmatpush1.msra.mxu0 %v404
        %440 = vmatprep.subr.mxu0 0.0
        %441 = vmatpush1.msra.mxu0 %v405
        %442 = vmatprep.subr.mxu0 0.0
        %443 = vmatpush1.msra.mxu0 %v406
        %444 = vmatprep.subr.mxu0 0.0
        %445 = vmatpush1.msra.mxu0 %v407
        %446 = vmatprep.subr.mxu0 0.0
        %447 = vmatpush1.msra.mxu0 %v408
        %448 = vmatprep.subr.mxu0 0.0
        %449 = vmatpush1.msra.mxu0 %v409
        %450 = vmatprep.subr.mxu0 0.0
        %451 = vmatpush1.msra.mxu0 %v410
        %452 = vmatprep.subr.mxu0 0.0
        %453 = vmatpush1.msra.mxu0 %v411
        %454 = vmatprep.subr.mxu0 0.0
        %455 = vmatpush1.msra.mxu0 %v412
        %456 = vmatprep.subr.mxu0 0.0
        %457 = vmatpush1.msra.mxu0 %v413
        %458 = vmatprep.subr.mxu0 0.0
        %459 = vmatpush1.msra.mxu0 %v414
        %460 = vmatprep.subr.mxu0 0.0
        %461 = vmatpush1.msra.mxu0 %v415
        %462 = vmatprep.subr.mxu0 0.0
        %463 = vmatpush1.msra.mxu0 %v416
        %464 = vmatprep.subr.mxu0 0.0
        %465 = vmatpush1.msra.mxu0 %v417
        %466 = vmatprep.subr.mxu0 0.0
        %467 = vmatpush1.msra.mxu0 %v418
        %468 = vmatprep.subr.mxu0 0.0
        %469 = vmatpush1.msra.mxu0 %v419
        %470 = vmatprep.subr.mxu0 0.0
        %471 = vmatpush1.msra.mxu0 %v420
        %472 = vmatprep.subr.mxu0 0.0
        %473 = vmatpush1.msra.mxu0 %v421
        %474 = vmatprep.subr.mxu0 0.0
        %475 = vmatpush1.msra.mxu0 %v422
        %476 = vmatprep.subr.mxu0 0.0
        %477 = vmatpush1.msra.mxu0 %v423
        %478 = vmatprep.subr.mxu0 0.0
        %479 = vmatpush1.msra.mxu0 %v424
        %480 = vmatprep.subr.mxu0 0.0
        %481 = vmatpush1.msra.mxu0 %v425
        %482 = vmatprep.subr.mxu0 0.0
        %483 = vmatpush1.msra.mxu0 %v426
        %484 = vmatprep.subr.mxu0 0.0
        %485 = vmatpush1.msra.mxu0 %v427
        %486 = vmatprep.subr.mxu0 0.0
        %487 = vmatpush1.msra.mxu0 %v428
        %488 = vmatprep.subr.mxu0 0.0
        %489 = vmatpush1.msra.mxu0 %v429
        %490 = vmatprep.subr.mxu0 0.0
        %491 = vmatpush1.msra.mxu0 %v430
        %492 = vmatprep.subr.mxu0 0.0
        %493 = vmatpush1.msra.mxu0 %v431
        %494 = vmatprep.subr.mxu0 0.0
        %495 = vmatpush1.msra.mxu0 %v432
        %496 = vmatprep.subr.mxu0 0.0
        %497 = vmatpush1.msra.mxu0 %v433
        %498 = vmatprep.mubr.f32.mxu0 %v401
        %499 = vmatmul.mubr.f32.gmra.mrb[0].mxu0 %v400
        %v500 = vpop.f32.mrb[0].mxu0
        %v501 = vadd.f32 0.0, %v500
        %v502 = vpop.f32.mrb[0].mxu0
        %503 = vdwg.mxu0
        %v504 = vld [vmem:[%s5] sm:$0xff]
        %v505 = vld [vmem:[%s5 + $0x8] sm:$0xff]
        %s506 = scalar_lea.vmem %s5, 16
        %v507 = vld [vmem:[%s506] sm:$0xff]
        %v508 = vld [vmem:[%s506 + $0x8] sm:$0xff]
        %v509 = vld [vmem:[%s6] sm:$0xff]
        %v510 = vld [vmem:[%s6 + $0x8] sm:$0xff]
        %v511 = vld [vmem:[%s6 + $0x10] sm:$0xff]
        %vm512 = vcmask 64512
        %v514 = vsel %vm512, %v509, 0
        %v517 = vsel %vm512, %v510, 0
        %v520 = vsel %vm512, %v511, 0
        %522 = vmatprep.subr.mxu0 0.0
        %523 = vmatpush1.msra.mxu0 %v501
        %524 = vmatprep.subr.mxu0 0.0
        %525 = vmatpush1.msra.mxu0 0.0
        %526 = vmatprep.subr.mxu0 0.0
        %527 = vmatpush1.msra.mxu0 0.0
        %528 = vmatprep.subr.mxu0 0.0
        %529 = vmatpush1.msra.mxu0 0.0
        %530 = vmatprep.subr.mxu0 0.0
        %531 = vmatpush1.msra.mxu0 0.0
        %532 = vmatprep.subr.mxu0 0.0
        %533 = vmatpush1.msra.mxu0 0.0
        %534 = vmatprep.subr.mxu0 0.0
        %535 = vmatpush1.msra.mxu0 0.0
        %536 = vmatprep.subr.mxu0 0.0
        %537 = vmatpush1.msra.mxu0 0.0
        %538 = vmatprep.subr.mxu0 0.0
        %539 = vmatpush1.msra.mxu0 0.0
        %540 = vmatprep.subr.mxu0 0.0
        %541 = vmatpush1.msra.mxu0 0.0
        %542 = vmatprep.subr.mxu0 0.0
        %543 = vmatpush1.msra.mxu0 0.0
        %544 = vmatprep.subr.mxu0 0.0
        %545 = vmatpush1.msra.mxu0 0.0
        %546 = vmatprep.subr.mxu0 0.0
        %547 = vmatpush1.msra.mxu0 0.0
        %548 = vmatprep.subr.mxu0 0.0
        %549 = vmatpush1.msra.mxu0 0.0
        %550 = vmatprep.subr.mxu0 0.0
        %551 = vmatpush1.msra.mxu0 0.0
        %552 = vmatprep.subr.mxu0 0.0
        %553 = vmatpush1.msra.mxu0 0.0
        %554 = vmatprep.subr.mxu0 0.0
        %555 = vmatpush1.msra.mxu0 0.0
        %556 = vmatprep.subr.mxu0 0.0
        %557 = vmatpush1.msra.mxu0 0.0
        %558 = vmatprep.subr.mxu0 0.0
        %559 = vmatpush1.msra.mxu0 0.0
        %560 = vmatprep.subr.mxu0 0.0
        %561 = vmatpush1.msra.mxu0 0.0
        %562 = vmatprep.subr.mxu0 0.0
        %563 = vmatpush1.msra.mxu0 0.0
        %564 = vmatprep.subr.mxu0 0.0
        %565 = vmatpush1.msra.mxu0 0.0
        %566 = vmatprep.subr.mxu0 0.0
        %567 = vmatpush1.msra.mxu0 0.0
        %568 = vmatprep.subr.mxu0 0.0
        %569 = vmatpush1.msra.mxu0 0.0
        %570 = vmatprep.subr.mxu0 0.0
        %571 = vmatpush1.msra.mxu0 0.0
        %572 = vmatprep.subr.mxu0 0.0
        %573 = vmatpush1.msra.mxu0 0.0
        %574 = vmatprep.subr.mxu0 0.0
        %575 = vmatpush1.msra.mxu0 0.0
        %576 = vmatprep.subr.mxu0 0.0
        %577 = vmatpush1.msra.mxu0 0.0
        %578 = vmatprep.subr.mxu0 0.0
        %579 = vmatpush1.msra.mxu0 0.0
        %580 = vmatprep.subr.mxu0 0.0
        %581 = vmatpush1.msra.mxu0 0.0
        %582 = vmatprep.subr.mxu0 0.0
        %583 = vmatpush1.msra.mxu0 0.0
        %584 = vmatprep.subr.mxu0 0.0
        %585 = vmatpush1.msra.mxu0 0.0
        %586 = vmatprep.mubr.f32.mxu0 0.0
        %587 = vmatmul.mubr.f32.gmra.mrb[0].mxu0 %v514
        %v588 = vpop.f32.mrb[0].mxu0
        %v589 = vadd.f32 0.0, %v588
        %v590 = vpop.f32.mrb[0].mxu0
        %591 = vmatprep.mubr.f32.mxu0 0.0
        %592 = vmatmul.mubr.f32.gmra.mrb[0].mxu0 %v517
        %v593 = vpop.f32.mrb[0].mxu0
        %v594 = vadd.f32 0.0, %v593
        %v595 = vpop.f32.mrb[0].mxu0
        %596 = vmatprep.mubr.f32.mxu0 0.0
        %597 = vmatmul.mubr.f32.gmra.mrb[0].mxu0 %v520
        %v598 = vpop.f32.mrb[0].mxu0
        %v599 = vadd.f32 0.0, %v598
        %v600 = vpop.f32.mrb[0].mxu0
        %601 = vdwg.mxu0
        %vm602 = vcmask 130048
        %v604 = vsel %vm602, %v589, 0
        %606 = vmatprep.subr.mxu0 0.0
        %607 = vmatpush1.msra.mxu0 %v504
        %608 = vmatprep.subr.mxu0 0.0
        %609 = vmatpush1.msra.mxu0 %v505
        %610 = vmatprep.subr.mxu0 0.0
        %611 = vmatpush1.msra.mxu0 0.0
        %612 = vmatprep.subr.mxu0 0.0
        %613 = vmatpush1.msra.mxu0 0.0
        %614 = vmatprep.subr.mxu0 0.0
        %615 = vmatpush1.msra.mxu0 0.0
        %616 = vmatprep.subr.mxu0 0.0
        %617 = vmatpush1.msra.mxu0 0.0
        %618 = vmatprep.subr.mxu0 0.0
        %619 = vmatpush1.msra.mxu0 0.0
        %620 = vmatprep.subr.mxu0 0.0
        %621 = vmatpush1.msra.mxu0 0.0
        %622 = vmatprep.subr.mxu0 0.0
        %623 = vmatpush1.msra.mxu0 0.0
        %624 = vmatprep.subr.mxu0 0.0
        %625 = vmatpush1.msra.mxu0 0.0
        %626 = vmatprep.subr.mxu0 0.0
        %627 = vmatpush1.msra.mxu0 0.0
        %628 = vmatprep.subr.mxu0 0.0
        %629 = vmatpush1.msra.mxu0 0.0
        %630 = vmatprep.subr.mxu0 0.0
        %631 = vmatpush1.msra.mxu0 0.0
        %632 = vmatprep.subr.mxu0 0.0
        %633 = vmatpush1.msra.mxu0 0.0
        %634 = vmatprep.subr.mxu0 0.0
        %635 = vmatpush1.msra.mxu0 0.0
        %636 = vmatprep.subr.mxu0 0.0
        %637 = vmatpush1.msra.mxu0 0.0
        %638 = vmatprep.subr.mxu0 0.0
        %639 = vmatpush1.msra.mxu0 0.0
        %640 = vmatprep.subr.mxu0 0.0
        %641 = vmatpush1.msra.mxu0 0.0
        %642 = vmatprep.subr.mxu0 0.0
        %643 = vmatpush1.msra.mxu0 0.0
        %644 = vmatprep.subr.mxu0 0.0
        %645 = vmatpush1.msra.mxu0 0.0
        %646 = vmatprep.subr.mxu0 0.0
        %647 = vmatpush1.msra.mxu0 0.0
        %648 = vmatprep.subr.mxu0 0.0
        %649 = vmatpush1.msra.mxu0 0.0
        %650 = vmatprep.subr.mxu0 0.0
        %651 = vmatpush1.msra.mxu0 0.0
        %652 = vmatprep.subr.mxu0 0.0
        %653 = vmatpush1.msra.mxu0 0.0
        %654 = vmatprep.subr.mxu0 0.0
        %655 = vmatpush1.msra.mxu0 0.0
        %656 = vmatprep.subr.mxu0 0.0
        %657 = vmatpush1.msra.mxu0 0.0
        %658 = vmatprep.subr.mxu0 0.0
        %659 = vmatpush1.msra.mxu0 0.0
        %660 = vmatprep.subr.mxu0 0.0
        %661 = vmatpush1.msra.mxu0 0.0
        %662 = vmatprep.subr.mxu0 0.0
        %663 = vmatpush1.msra.mxu0 0.0
        %664 = vmatprep.subr.mxu0 0.0
        %665 = vmatpush1.msra.mxu0 0.0
        %666 = vmatprep.subr.mxu0 0.0
        %667 = vmatpush1.msra.mxu0 0.0
        %668 = vmatprep.subr.mxu0 0.0
        %669 = vmatpush1.msra.mxu0 0.0
        %670 = vmatprep.mubr.f32.mxu0 0.0
        %671 = vmatmul.mubr.f32.gmra.mrb[0].mxu0 %v604
        %v672 = vpop.f32.mrb[0].mxu0
        %v673 = vadd.f32 %v594, %v672
        %v674 = vpop.f32.mrb[0].mxu0
        %675 = vdwg.mxu0
        %v677 = vsel %vm602, %v599, 0
        %679 = vmatprep.subr.mxu0 0.0
        %680 = vmatpush1.msra.mxu0 %v507
        %681 = vmatprep.subr.mxu0 0.0
        %682 = vmatpush1.msra.mxu0 %v508
        %683 = vmatprep.subr.mxu0 0.0
        %684 = vmatpush1.msra.mxu0 0.0
        %685 = vmatprep.subr.mxu0 0.0
        %686 = vmatpush1.msra.mxu0 0.0
        %687 = vmatprep.subr.mxu0 0.0
        %688 = vmatpush1.msra.mxu0 0.0
        %689 = vmatprep.subr.mxu0 0.0
        %690 = vmatpush1.msra.mxu0 0.0
        %691 = vmatprep.subr.mxu0 0.0
        %692 = vmatpush1.msra.mxu0 0.0
        %693 = vmatprep.subr.mxu0 0.0
        %694 = vmatpush1.msra.mxu0 0.0
        %695 = vmatprep.subr.mxu0 0.0
        %696 = vmatpush1.msra.mxu0 0.0
        %697 = vmatprep.subr.mxu0 0.0
        %698 = vmatpush1.msra.mxu0 0.0
        %699 = vmatprep.subr.mxu0 0.0
        %700 = vmatpush1.msra.mxu0 0.0
        %701 = vmatprep.subr.mxu0 0.0
        %702 = vmatpush1.msra.mxu0 0.0
        %703 = vmatprep.subr.mxu0 0.0
        %704 = vmatpush1.msra.mxu0 0.0
        %705 = vmatprep.subr.mxu0 0.0
        %706 = vmatpush1.msra.mxu0 0.0
        %707 = vmatprep.subr.mxu0 0.0
        %708 = vmatpush1.msra.mxu0 0.0
        %709 = vmatprep.subr.mxu0 0.0
        %710 = vmatpush1.msra.mxu0 0.0
        %711 = vmatprep.subr.mxu0 0.0
        %712 = vmatpush1.msra.mxu0 0.0
        %713 = vmatprep.subr.mxu0 0.0
        %714 = vmatpush1.msra.mxu0 0.0
        %715 = vmatprep.subr.mxu0 0.0
        %716 = vmatpush1.msra.mxu0 0.0
        %717 = vmatprep.subr.mxu0 0.0
        %718 = vmatpush1.msra.mxu0 0.0
        %719 = vmatprep.subr.mxu0 0.0
        %720 = vmatpush1.msra.mxu0 0.0
        %721 = vmatprep.subr.mxu0 0.0
        %722 = vmatpush1.msra.mxu0 0.0
        %723 = vmatprep.subr.mxu0 0.0
        %724 = vmatpush1.msra.mxu0 0.0
        %725 = vmatprep.subr.mxu0 0.0
        %726 = vmatpush1.msra.mxu0 0.0
        %727 = vmatprep.subr.mxu0 0.0
        %728 = vmatpush1.msra.mxu0 0.0
        %729 = vmatprep.subr.mxu0 0.0
        %730 = vmatpush1.msra.mxu0 0.0
        %731 = vmatprep.subr.mxu0 0.0
        %732 = vmatpush1.msra.mxu0 0.0
        %733 = vmatprep.subr.mxu0 0.0
        %734 = vmatpush1.msra.mxu0 0.0
        %735 = vmatprep.subr.mxu0 0.0
        %736 = vmatpush1.msra.mxu0 0.0
        %737 = vmatprep.subr.mxu0 0.0
        %738 = vmatpush1.msra.mxu0 0.0
        %739 = vmatprep.subr.mxu0 0.0
        %740 = vmatpush1.msra.mxu0 0.0
        %741 = vmatprep.subr.mxu0 0.0
        %742 = vmatpush1.msra.mxu0 0.0
        %743 = vmatprep.mubr.f32.mxu0 0.0
        %744 = vmatmul.mubr.f32.gmra.mrb[0].mxu0 %v677
        %v745 = vpop.f32.mrb[0].mxu0
        %v746 = vadd.f32 0.0, %v745
        %v747 = vpop.f32.mrb[0].mxu0
        %748 = vdwg.mxu0
        %v749 = vadd.f32 %v673, %v746
        %v750 = vld [vmem:[%s7] sm:$0xff]
        %752 = vset.pattern.permute.xlu0 0
        %753 = vperm.xlu0 %752, %v750
        %v754 = vpop.permute.xlu0 %753
        %v756 = vadd.f32 %v749, %v754
        %v757 = vmax.f32 %v756, 0.0
        %s758 = scalar_lea.vmem %s6, 24
        %v759 = vld [vmem:[%s758] sm:$0xff]
        %v760 = vld [vmem:[%s758 + $0x8] sm:$0xff]
        %v761 = vld [vmem:[%s758 + $0x10] sm:$0xff]
        %v763 = vsel %vm512, %v759, 0
        %v766 = vsel %vm512, %v760, 0
        %v769 = vsel %vm512, %v761, 0
        %771 = vmatprep.subr.mxu0 0.0
        %772 = vmatpush1.msra.mxu0 %v757
        %773 = vmatprep.subr.mxu0 0.0
        %774 = vmatpush1.msra.mxu0 0.0
        %775 = vmatprep.subr.mxu0 0.0
        %776 = vmatpush1.msra.mxu0 0.0
        %777 = vmatprep.subr.mxu0 0.0
        %778 = vmatpush1.msra.mxu0 0.0
        %779 = vmatprep.subr.mxu0 0.0
        %780 = vmatpush1.msra.mxu0 0.0
        %781 = vmatprep.subr.mxu0 0.0
        %782 = vmatpush1.msra.mxu0 0.0
        %783 = vmatprep.subr.mxu0 0.0
        %784 = vmatpush1.msra.mxu0 0.0
        %785 = vmatprep.subr.mxu0 0.0
        %786 = vmatpush1.msra.mxu0 0.0
        %787 = vmatprep.subr.mxu0 0.0
        %788 = vmatpush1.msra.mxu0 0.0
        %789 = vmatprep.subr.mxu0 0.0
        %790 = vmatpush1.msra.mxu0 0.0
        %791 = vmatprep.subr.mxu0 0.0
        %792 = vmatpush1.msra.mxu0 0.0
        %793 = vmatprep.subr.mxu0 0.0
        %794 = vmatpush1.msra.mxu0 0.0
        %795 = vmatprep.subr.mxu0 0.0
        %796 = vmatpush1.msra.mxu0 0.0
        %797 = vmatprep.subr.mxu0 0.0
        %798 = vmatpush1.msra.mxu0 0.0
        %799 = vmatprep.subr.mxu0 0.0
        %800 = vmatpush1.msra.mxu0 0.0
        %801 = vmatprep.subr.mxu0 0.0
        %802 = vmatpush1.msra.mxu0 0.0
        %803 = vmatprep.subr.mxu0 0.0
        %804 = vmatpush1.msra.mxu0 0.0
        %805 = vmatprep.subr.mxu0 0.0
        %806 = vmatpush1.msra.mxu0 0.0
        %807 = vmatprep.subr.mxu0 0.0
        %808 = vmatpush1.msra.mxu0 0.0
        %809 = vmatprep.subr.mxu0 0.0
        %810 = vmatpush1.msra.mxu0 0.0
        %811 = vmatprep.subr.mxu0 0.0
        %812 = vmatpush1.msra.mxu0 0.0
        %813 = vmatprep.subr.mxu0 0.0
        %814 = vmatpush1.msra.mxu0 0.0
        %815 = vmatprep.subr.mxu0 0.0
        %816 = vmatpush1.msra.mxu0 0.0
        %817 = vmatprep.subr.mxu0 0.0
        %818 = vmatpush1.msra.mxu0 0.0
        %819 = vmatprep.subr.mxu0 0.0
        %820 = vmatpush1.msra.mxu0 0.0
        %821 = vmatprep.subr.mxu0 0.0
        %822 = vmatpush1.msra.mxu0 0.0
        %823 = vmatprep.subr.mxu0 0.0
        %824 = vmatpush1.msra.mxu0 0.0
        %825 = vmatprep.subr.mxu0 0.0
        %826 = vmatpush1.msra.mxu0 0.0
        %827 = vmatprep.subr.mxu0 0.0
        %828 = vmatpush1.msra.mxu0 0.0
        %829 = vmatprep.subr.mxu0 0.0
        %830 = vmatpush1.msra.mxu0 0.0
        %831 = vmatprep.subr.mxu0 0.0
        %832 = vmatpush1.msra.mxu0 0.0
        %833 = vmatprep.subr.mxu0 0.0
        %834 = vmatpush1.msra.mxu0 0.0
        %835 = vmatprep.mubr.f32.mxu0 0.0
        %836 = vmatmul.mubr.f32.gmra.mrb[0].mxu0 %v763
        %v837 = vpop.f32.mrb[0].mxu0
        %v838 = vadd.f32 0.0, %v837
        %v839 = vpop.f32.mrb[0].mxu0
        %840 = vmatprep.mubr.f32.mxu0 0.0
        %841 = vmatmul.mubr.f32.gmra.mrb[0].mxu0 %v766
        %v842 = vpop.f32.mrb[0].mxu0
        %v843 = vadd.f32 0.0, %v842
        %v844 = vpop.f32.mrb[0].mxu0
        %845 = vmatprep.mubr.f32.mxu0 0.0
        %846 = vmatmul.mubr.f32.gmra.mrb[0].mxu0 %v769
        %v847 = vpop.f32.mrb[0].mxu0
        %v848 = vadd.f32 0.0, %v847
        %v849 = vpop.f32.mrb[0].mxu0
        %850 = vdwg.mxu0
        %v852 = vsel %vm602, %v838, 0
        %854 = vmatprep.subr.mxu0 0.0
        %855 = vmatpush1.msra.mxu0 %v504
        %856 = vmatprep.subr.mxu0 0.0
        %857 = vmatpush1.msra.mxu0 %v505
        %858 = vmatprep.subr.mxu0 0.0
        %859 = vmatpush1.msra.mxu0 0.0
        %860 = vmatprep.subr.mxu0 0.0
        %861 = vmatpush1.msra.mxu0 0.0
        %862 = vmatprep.subr.mxu0 0.0
        %863 = vmatpush1.msra.mxu0 0.0
        %864 = vmatprep.subr.mxu0 0.0
        %865 = vmatpush1.msra.mxu0 0.0
        %866 = vmatprep.subr.mxu0 0.0
        %867 = vmatpush1.msra.mxu0 0.0
        %868 = vmatprep.subr.mxu0 0.0
        %869 = vmatpush1.msra.mxu0 0.0
        %870 = vmatprep.subr.mxu0 0.0
        %871 = vmatpush1.msra.mxu0 0.0
        %872 = vmatprep.subr.mxu0 0.0
        %873 = vmatpush1.msra.mxu0 0.0
        %874 = vmatprep.subr.mxu0 0.0
        %875 = vmatpush1.msra.mxu0 0.0
        %876 = vmatprep.subr.mxu0 0.0
        %877 = vmatpush1.msra.mxu0 0.0
        %878 = vmatprep.subr.mxu0 0.0
        %879 = vmatpush1.msra.mxu0 0.0
        %880 = vmatprep.subr.mxu0 0.0
        %881 = vmatpush1.msra.mxu0 0.0
        %882 = vmatprep.subr.mxu0 0.0
        %883 = vmatpush1.msra.mxu0 0.0
        %884 = vmatprep.subr.mxu0 0.0
        %885 = vmatpush1.msra.mxu0 0.0
        %886 = vmatprep.subr.mxu0 0.0
        %887 = vmatpush1.msra.mxu0 0.0
        %888 = vmatprep.subr.mxu0 0.0
        %889 = vmatpush1.msra.mxu0 0.0
        %890 = vmatprep.subr.mxu0 0.0
        %891 = vmatpush1.msra.mxu0 0.0
        %892 = vmatprep.subr.mxu0 0.0
        %893 = vmatpush1.msra.mxu0 0.0
        %894 = vmatprep.subr.mxu0 0.0
        %895 = vmatpush1.msra.mxu0 0.0
        %896 = vmatprep.subr.mxu0 0.0
        %897 = vmatpush1.msra.mxu0 0.0
        %898 = vmatprep.subr.mxu0 0.0
        %899 = vmatpush1.msra.mxu0 0.0
        %900 = vmatprep.subr.mxu0 0.0
        %901 = vmatpush1.msra.mxu0 0.0
        %902 = vmatprep.subr.mxu0 0.0
        %903 = vmatpush1.msra.mxu0 0.0
        %904 = vmatprep.subr.mxu0 0.0
        %905 = vmatpush1.msra.mxu0 0.0
        %906 = vmatprep.subr.mxu0 0.0
        %907 = vmatpush1.msra.mxu0 0.0
        %908 = vmatprep.subr.mxu0 0.0
        %909 = vmatpush1.msra.mxu0 0.0
        %910 = vmatprep.subr.mxu0 0.0
        %911 = vmatpush1.msra.mxu0 0.0
        %912 = vmatprep.subr.mxu0 0.0
        %913 = vmatpush1.msra.mxu0 0.0
        %914 = vmatprep.subr.mxu0 0.0
        %915 = vmatpush1.msra.mxu0 0.0
        %916 = vmatprep.subr.mxu0 0.0
        %917 = vmatpush1.msra.mxu0 0.0
        %918 = vmatprep.mubr.f32.mxu0 0.0
        %919 = vmatmul.mubr.f32.gmra.mrb[0].mxu0 %v852
        %v920 = vpop.f32.mrb[0].mxu0
        %v921 = vadd.f32 %v843, %v920
        %v922 = vpop.f32.mrb[0].mxu0
        %923 = vdwg.mxu0
        %v925 = vsel %vm602, %v848, 0
        %927 = vmatprep.subr.mxu0 0.0
        %928 = vmatpush1.msra.mxu0 %v507
        %929 = vmatprep.subr.mxu0 0.0
        %930 = vmatpush1.msra.mxu0 %v508
        %931 = vmatprep.subr.mxu0 0.0
        %932 = vmatpush1.msra.mxu0 0.0
        %933 = vmatprep.subr.mxu0 0.0
        %934 = vmatpush1.msra.mxu0 0.0
        %935 = vmatprep.subr.mxu0 0.0
        %936 = vmatpush1.msra.mxu0 0.0
        %937 = vmatprep.subr.mxu0 0.0
        %938 = vmatpush1.msra.mxu0 0.0
        %939 = vmatprep.subr.mxu0 0.0
        %940 = vmatpush1.msra.mxu0 0.0
        %941 = vmatprep.subr.mxu0 0.0
        %942 = vmatpush1.msra.mxu0 0.0
        %943 = vmatprep.subr.mxu0 0.0
        %944 = vmatpush1.msra.mxu0 0.0
        %945 = vmatprep.subr.mxu0 0.0
        %946 = vmatpush1.msra.mxu0 0.0
        %947 = vmatprep.subr.mxu0 0.0
        %948 = vmatpush1.msra.mxu0 0.0
        %949 = vmatprep.subr.mxu0 0.0
        %950 = vmatpush1.msra.mxu0 0.0
        %951 = vmatprep.subr.mxu0 0.0
        %952 = vmatpush1.msra.mxu0 0.0
        %953 = vmatprep.subr.mxu0 0.0
        %954 = vmatpush1.msra.mxu0 0.0
        %955 = vmatprep.subr.mxu0 0.0
        %956 = vmatpush1.msra.mxu0 0.0
        %957 = vmatprep.subr.mxu0 0.0
        %958 = vmatpush1.msra.mxu0 0.0
        %959 = vmatprep.subr.mxu0 0.0
        %960 = vmatpush1.msra.mxu0 0.0
        %961 = vmatprep.subr.mxu0 0.0
        %962 = vmatpush1.msra.mxu0 0.0
        %963 = vmatprep.subr.mxu0 0.0
        %964 = vmatpush1.msra.mxu0 0.0
        %965 = vmatprep.subr.mxu0 0.0
        %966 = vmatpush1.msra.mxu0 0.0
        %967 = vmatprep.subr.mxu0 0.0
        %968 = vmatpush1.msra.mxu0 0.0
        %969 = vmatprep.subr.mxu0 0.0
        %970 = vmatpush1.msra.mxu0 0.0
        %971 = vmatprep.subr.mxu0 0.0
        %972 = vmatpush1.msra.mxu0 0.0
        %973 = vmatprep.subr.mxu0 0.0
        %974 = vmatpush1.msra.mxu0 0.0
        %975 = vmatprep.subr.mxu0 0.0
        %976 = vmatpush1.msra.mxu0 0.0
        %977 = vmatprep.subr.mxu0 0.0
        %978 = vmatpush1.msra.mxu0 0.0
        %979 = vmatprep.subr.mxu0 0.0
        %980 = vmatpush1.msra.mxu0 0.0
        %981 = vmatprep.subr.mxu0 0.0
        %982 = vmatpush1.msra.mxu0 0.0
        %983 = vmatprep.subr.mxu0 0.0
        %984 = vmatpush1.msra.mxu0 0.0
        %985 = vmatprep.subr.mxu0 0.0
        %986 = vmatpush1.msra.mxu0 0.0
        %987 = vmatprep.subr.mxu0 0.0
        %988 = vmatpush1.msra.mxu0 0.0
        %989 = vmatprep.subr.mxu0 0.0
        %990 = vmatpush1.msra.mxu0 0.0
        %991 = vmatprep.mubr.f32.mxu0 0.0
        %992 = vmatmul.mubr.f32.gmra.mrb[0].mxu0 %v925
        %v993 = vpop.f32.mrb[0].mxu0
        %v994 = vadd.f32 0.0, %v993
        %v995 = vpop.f32.mrb[0].mxu0
        %996 = vdwg.mxu0
        %v997 = vadd.f32 %v921, %v994
        %998 = vset.pattern.permute.xlu0 1
        %999 = vperm.xlu0 %998, %v750
        %v1000 = vpop.permute.xlu0 %999
        %v1002 = vadd.f32 %v997, %v1000
        %v1003 = vadd.f32 %v1002, %v501
        %v1004 = vmax.f32 %v1003, 0.0
        %s1005 = scalar_lea.vmem %s6, 48
        %v1006 = vld [vmem:[%s1005] sm:$0xff]
        %v1007 = vld [vmem:[%s1005 + $0x8] sm:$0xff]
        %v1008 = vld [vmem:[%s1005 + $0x10] sm:$0xff]
        %v1010 = vsel %vm512, %v1006, 0
        %v1013 = vsel %vm512, %v1007, 0
        %v1016 = vsel %vm512, %v1008, 0
        %1018 = vmatprep.subr.mxu0 0.0
        %1019 = vmatpush1.msra.mxu0 %v1004
        %1020 = vmatprep.subr.mxu0 0.0
        %1021 = vmatpush1.msra.mxu0 0.0
        %1022 = vmatprep.subr.mxu0 0.0
        %1023 = vmatpush1.msra.mxu0 0.0
        %1024 = vmatprep.subr.mxu0 0.0
        %1025 = vmatpush1.msra.mxu0 0.0
        %1026 = vmatprep.subr.mxu0 0.0
        %1027 = vmatpush1.msra.mxu0 0.0
        %1028 = vmatprep.subr.mxu0 0.0
        %1029 = vmatpush1.msra.mxu0 0.0
        %1030 = vmatprep.subr.mxu0 0.0
        %1031 = vmatpush1.msra.mxu0 0.0
        %1032 = vmatprep.subr.mxu0 0.0
        %1033 = vmatpush1.msra.mxu0 0.0
        %1034 = vmatprep.subr.mxu0 0.0
        %1035 = vmatpush1.msra.mxu0 0.0
        %1036 = vmatprep.subr.mxu0 0.0
        %1037 = vmatpush1.msra.mxu0 0.0
        %1038 = vmatprep.subr.mxu0 0.0
        %1039 = vmatpush1.msra.mxu0 0.0
        %1040 = vmatprep.subr.mxu0 0.0
        %1041 = vmatpush1.msra.mxu0 0.0
        %1042 = vmatprep.subr.mxu0 0.0
        %1043 = vmatpush1.msra.mxu0 0.0
        %1044 = vmatprep.subr.mxu0 0.0
        %1045 = vmatpush1.msra.mxu0 0.0
        %1046 = vmatprep.subr.mxu0 0.0
        %1047 = vmatpush1.msra.mxu0 0.0
        %1048 = vmatprep.subr.mxu0 0.0
        %1049 = vmatpush1.msra.mxu0 0.0
        %1050 = vmatprep.subr.mxu0 0.0
        %1051 = vmatpush1.msra.mxu0 0.0
        %1052 = vmatprep.subr.mxu0 0.0
        %1053 = vmatpush1.msra.mxu0 0.0
        %1054 = vmatprep.subr.mxu0 0.0
        %1055 = vmatpush1.msra.mxu0 0.0
        %1056 = vmatprep.subr.mxu0 0.0
        %1057 = vmatpush1.msra.mxu0 0.0
        %1058 = vmatprep.subr.mxu0 0.0
        %1059 = vmatpush1.msra.mxu0 0.0
        %1060 = vmatprep.subr.mxu0 0.0
        %1061 = vmatpush1.msra.mxu0 0.0
        %1062 = vmatprep.subr.mxu0 0.0
        %1063 = vmatpush1.msra.mxu0 0.0
        %1064 = vmatprep.subr.mxu0 0.0
        %1065 = vmatpush1.msra.mxu0 0.0
        %1066 = vmatprep.subr.mxu0 0.0
        %1067 = vmatpush1.msra.mxu0 0.0
        %1068 = vmatprep.subr.mxu0 0.0
        %1069 = vmatpush1.msra.mxu0 0.0
        %1070 = vmatprep.subr.mxu0 0.0
        %1071 = vmatpush1.msra.mxu0 0.0
        %1072 = vmatprep.subr.mxu0 0.0
        %1073 = vmatpush1.msra.mxu0 0.0
        %1074 = vmatprep.subr.mxu0 0.0
        %1075 = vmatpush1.msra.mxu0 0.0
        %1076 = vmatprep.subr.mxu0 0.0
        %1077 = vmatpush1.msra.mxu0 0.0
        %1078 = vmatprep.subr.mxu0 0.0
        %1079 = vmatpush1.msra.mxu0 0.0
        %1080 = vmatprep.subr.mxu0 0.0
        %1081 = vmatpush1.msra.mxu0 0.0
        %1082 = vmatprep.mubr.f32.mxu0 0.0
        %1083 = vmatmul.mubr.f32.gmra.mrb[0].mxu0 %v1010
        %v1084 = vpop.f32.mrb[0].mxu0
        %v1085 = vadd.f32 0.0, %v1084
        %v1086 = vpop.f32.mrb[0].mxu0
        %1087 = vmatprep.mubr.f32.mxu0 0.0
        %1088 = vmatmul.mubr.f32.gmra.mrb[0].mxu0 %v1013
        %v1089 = vpop.f32.mrb[0].mxu0
        %v1090 = vadd.f32 0.0, %v1089
        %v1091 = vpop.f32.mrb[0].mxu0
        %1092 = vmatprep.mubr.f32.mxu0 0.0
        %1093 = vmatmul.mubr.f32.gmra.mrb[0].mxu0 %v1016
        %v1094 = vpop.f32.mrb[0].mxu0
        %v1095 = vadd.f32 0.0, %v1094
        %v1096 = vpop.f32.mrb[0].mxu0
        %1097 = vdwg.mxu0
        %v1099 = vsel %vm602, %v1085, 0
        %1101 = vmatprep.subr.mxu0 0.0
        %1102 = vmatpush1.msra.mxu0 %v504
        %1103 = vmatprep.subr.mxu0 0.0
        %1104 = vmatpush1.msra.mxu0 %v505
        %1105 = vmatprep.subr.mxu0 0.0
        %1106 = vmatpush1.msra.mxu0 0.0
        %1107 = vmatprep.subr.mxu0 0.0
        %1108 = vmatpush1.msra.mxu0 0.0
        %1109 = vmatprep.subr.mxu0 0.0
        %1110 = vmatpush1.msra.mxu0 0.0
        %1111 = vmatprep.subr.mxu0 0.0
        %1112 = vmatpush1.msra.mxu0 0.0
        %1113 = vmatprep.subr.mxu0 0.0
        %1114 = vmatpush1.msra.mxu0 0.0
        %1115 = vmatprep.subr.mxu0 0.0
        %1116 = vmatpush1.msra.mxu0 0.0
        %1117 = vmatprep.subr.mxu0 0.0
        %1118 = vmatpush1.msra.mxu0 0.0
        %1119 = vmatprep.subr.mxu0 0.0
        %1120 = vmatpush1.msra.mxu0 0.0
        %1121 = vmatprep.subr.mxu0 0.0
        %1122 = vmatpush1.msra.mxu0 0.0
        %1123 = vmatprep.subr.mxu0 0.0
        %1124 = vmatpush1.msra.mxu0 0.0
        %1125 = vmatprep.subr.mxu0 0.0
        %1126 = vmatpush1.msra.mxu0 0.0
        %1127 = vmatprep.subr.mxu0 0.0
        %1128 = vmatpush1.msra.mxu0 0.0
        %1129 = vmatprep.subr.mxu0 0.0
        %1130 = vmatpush1.msra.mxu0 0.0
        %1131 = vmatprep.subr.mxu0 0.0
        %1132 = vmatpush1.msra.mxu0 0.0
        %1133 = vmatprep.subr.mxu0 0.0
        %1134 = vmatpush1.msra.mxu0 0.0
        %1135 = vmatprep.subr.mxu0 0.0
        %1136 = vmatpush1.msra.mxu0 0.0
        %1137 = vmatprep.subr.mxu0 0.0
        %1138 = vmatpush1.msra.mxu0 0.0
        %1139 = vmatprep.subr.mxu0 0.0
        %1140 = vmatpush1.msra.mxu0 0.0
        %1141 = vmatprep.subr.mxu0 0.0
        %1142 = vmatpush1.msra.mxu0 0.0
        %1143 = vmatprep.subr.mxu0 0.0
        %1144 = vmatpush1.msra.mxu0 0.0
        %1145 = vmatprep.subr.mxu0 0.0
        %1146 = vmatpush1.msra.mxu0 0.0
        %1147 = vmatprep.subr.mxu0 0.0
        %1148 = vmatpush1.msra.mxu0 0.0
        %1149 = vmatprep.subr.mxu0 0.0
        %1150 = vmatpush1.msra.mxu0 0.0
        %1151 = vmatprep.subr.mxu0 0.0
        %1152 = vmatpush1.msra.mxu0 0.0
        %1153 = vmatprep.subr.mxu0 0.0
        %1154 = vmatpush1.msra.mxu0 0.0
        %1155 = vmatprep.subr.mxu0 0.0
        %1156 = vmatpush1.msra.mxu0 0.0
        %1157 = vmatprep.subr.mxu0 0.0
        %1158 = vmatpush1.msra.mxu0 0.0
        %1159 = vmatprep.subr.mxu0 0.0
        %1160 = vmatpush1.msra.mxu0 0.0
        %1161 = vmatprep.subr.mxu0 0.0
        %1162 = vmatpush1.msra.mxu0 0.0
        %1163 = vmatprep.subr.mxu0 0.0
        %1164 = vmatpush1.msra.mxu0 0.0
        %1165 = vmatprep.mubr.f32.mxu0 0.0
        %1166 = vmatmul.mubr.f32.gmra.mrb[0].mxu0 %v1099
        %v1167 = vpop.f32.mrb[0].mxu0
        %v1168 = vadd.f32 %v1090, %v1167
        %v1169 = vpop.f32.mrb[0].mxu0
        %1170 = vdwg.mxu0
        %v1172 = vsel %vm602, %v1095, 0
        %1174 = vmatprep.subr.mxu0 0.0
        %1175 = vmatpush1.msra.mxu0 %v507
        %1176 = vmatprep.subr.mxu0 0.0
        %1177 = vmatpush1.msra.mxu0 %v508
        %1178 = vmatprep.subr.mxu0 0.0
        %1179 = vmatpush1.msra.mxu0 0.0
        %1180 = vmatprep.subr.mxu0 0.0
        %1181 = vmatpush1.msra.mxu0 0.0
        %1182 = vmatprep.subr.mxu0 0.0
        %1183 = vmatpush1.msra.mxu0 0.0
        %1184 = vmatprep.subr.mxu0 0.0
        %1185 = vmatpush1.msra.mxu0 0.0
        %1186 = vmatprep.subr.mxu0 0.0
        %1187 = vmatpush1.msra.mxu0 0.0
        %1188 = vmatprep.subr.mxu0 0.0
        %1189 = vmatpush1.msra.mxu0 0.0
        %1190 = vmatprep.subr.mxu0 0.0
        %1191 = vmatpush1.msra.mxu0 0.0
        %1192 = vmatprep.subr.mxu0 0.0
        %1193 = vmatpush1.msra.mxu0 0.0
        %1194 = vmatprep.subr.mxu0 0.0
        %1195 = vmatpush1.msra.mxu0 0.0
        %1196 = vmatprep.subr.mxu0 0.0
        %1197 = vmatpush1.msra.mxu0 0.0
        %1198 = vmatprep.subr.mxu0 0.0
        %1199 = vmatpush1.msra.mxu0 0.0
        %1200 = vmatprep.subr.mxu0 0.0
        %1201 = vmatpush1.msra.mxu0 0.0
        %1202 = vmatprep.subr.mxu0 0.0
        %1203 = vmatpush1.msra.mxu0 0.0
        %1204 = vmatprep.subr.mxu0 0.0
        %1205 = vmatpush1.msra.mxu0 0.0
        %1206 = vmatprep.subr.mxu0 0.0
        %1207 = vmatpush1.msra.mxu0 0.0
        %1208 = vmatprep.subr.mxu0 0.0
        %1209 = vmatpush1.msra.mxu0 0.0
        %1210 = vmatprep.subr.mxu0 0.0
        %1211 = vmatpush1.msra.mxu0 0.0
        %1212 = vmatprep.subr.mxu0 0.0
        %1213 = vmatpush1.msra.mxu0 0.0
        %1214 = vmatprep.subr.mxu0 0.0
        %1215 = vmatpush1.msra.mxu0 0.0
        %1216 = vmatprep.subr.mxu0 0.0
        %1217 = vmatpush1.msra.mxu0 0.0
        %1218 = vmatprep.subr.mxu0 0.0
        %1219 = vmatpush1.msra.mxu0 0.0
        %1220 = vmatprep.subr.mxu0 0.0
        %1221 = vmatpush1.msra.mxu0 0.0
        %1222 = vmatprep.subr.mxu0 0.0
        %1223 = vmatpush1.msra.mxu0 0.0
        %1224 = vmatprep.subr.mxu0 0.0
        %1225 = vmatpush1.msra.mxu0 0.0
        %1226 = vmatprep.subr.mxu0 0.0
        %1227 = vmatpush1.msra.mxu0 0.0
        %1228 = vmatprep.subr.mxu0 0.0
        %1229 = vmatpush1.msra.mxu0 0.0
        %1230 = vmatprep.subr.mxu0 0.0
        %1231 = vmatpush1.msra.mxu0 0.0
        %1232 = vmatprep.subr.mxu0 0.0
        %1233 = vmatpush1.msra.mxu0 0.0
        %1234 = vmatprep.subr.mxu0 0.0
        %1235 = vmatpush1.msra.mxu0 0.0
        %1236 = vmatprep.subr.mxu0 0.0
        %1237 = vmatpush1.msra.mxu0 0.0
        %1238 = vmatprep.mubr.f32.mxu0 0.0
        %1239 = vmatmul.mubr.f32.gmra.mrb[0].mxu0 %v1172
        %v1240 = vpop.f32.mrb[0].mxu0
        %v1241 = vadd.f32 0.0, %v1240
        %v1242 = vpop.f32.mrb[0].mxu0
        %1243 = vdwg.mxu0
        %v1244 = vadd.f32 %v1168, %v1241
        %1245 = vset.pattern.permute.xlu0 2
        %1246 = vperm.xlu0 %1245, %v750
        %v1247 = vpop.permute.xlu0 %1246
        %v1249 = vadd.f32 %v1244, %v1247
        %v1250 = vmax.f32 %v1249, 0.0
        %s1251 = scalar_lea.vmem %s6, 72
        %v1252 = vld [vmem:[%s1251] sm:$0xff]
        %v1253 = vld [vmem:[%s1251 + $0x8] sm:$0xff]
        %v1254 = vld [vmem:[%s1251 + $0x10] sm:$0xff]
        %v1256 = vsel %vm512, %v1252, 0
        %v1259 = vsel %vm512, %v1253, 0
        %v1262 = vsel %vm512, %v1254, 0
        %1264 = vmatprep.subr.mxu0 0.0
        %1265 = vmatpush1.msra.mxu0 %v1250
        %1266 = vmatprep.subr.mxu0 0.0
        %1267 = vmatpush1.msra.mxu0 0.0
        %1268 = vmatprep.subr.mxu0 0.0
        %1269 = vmatpush1.msra.mxu0 0.0
        %1270 = vmatprep.subr.mxu0 0.0
        %1271 = vmatpush1.msra.mxu0 0.0
        %1272 = vmatprep.subr.mxu0 0.0
        %1273 = vmatpush1.msra.mxu0 0.0
        %1274 = vmatprep.subr.mxu0 0.0
        %1275 = vmatpush1.msra.mxu0 0.0
        %1276 = vmatprep.subr.mxu0 0.0
        %1277 = vmatpush1.msra.mxu0 0.0
        %1278 = vmatprep.subr.mxu0 0.0
        %1279 = vmatpush1.msra.mxu0 0.0
        %1280 = vmatprep.subr.mxu0 0.0
        %1281 = vmatpush1.msra.mxu0 0.0
        %1282 = vmatprep.subr.mxu0 0.0
        %1283 = vmatpush1.msra.mxu0 0.0
        %1284 = vmatprep.subr.mxu0 0.0
        %1285 = vmatpush1.msra.mxu0 0.0
        %1286 = vmatprep.subr.mxu0 0.0
        %1287 = vmatpush1.msra.mxu0 0.0
        %1288 = vmatprep.subr.mxu0 0.0
        %1289 = vmatpush1.msra.mxu0 0.0
        %1290 = vmatprep.subr.mxu0 0.0
        %1291 = vmatpush1.msra.mxu0 0.0
        %1292 = vmatprep.subr.mxu0 0.0
        %1293 = vmatpush1.msra.mxu0 0.0
        %1294 = vmatprep.subr.mxu0 0.0
        %1295 = vmatpush1.msra.mxu0 0.0
        %1296 = vmatprep.subr.mxu0 0.0
        %1297 = vmatpush1.msra.mxu0 0.0
        %1298 = vmatprep.subr.mxu0 0.0
        %1299 = vmatpush1.msra.mxu0 0.0
        %1300 = vmatprep.subr.mxu0 0.0
        %1301 = vmatpush1.msra.mxu0 0.0
        %1302 = vmatprep.subr.mxu0 0.0
        %1303 = vmatpush1.msra.mxu0 0.0
        %1304 = vmatprep.subr.mxu0 0.0
        %1305 = vmatpush1.msra.mxu0 0.0
        %1306 = vmatprep.subr.mxu0 0.0
        %1307 = vmatpush1.msra.mxu0 0.0
        %1308 = vmatprep.subr.mxu0 0.0
        %1309 = vmatpush1.msra.mxu0 0.0
        %1310 = vmatprep.subr.mxu0 0.0
        %1311 = vmatpush1.msra.mxu0 0.0
        %1312 = vmatprep.subr.mxu0 0.0
        %1313 = vmatpush1.msra.mxu0 0.0
        %1314 = vmatprep.subr.mxu0 0.0
        %1315 = vmatpush1.msra.mxu0 0.0
        %1316 = vmatprep.subr.mxu0 0.0
        %1317 = vmatpush1.msra.mxu0 0.0
        %1318 = vmatprep.subr.mxu0 0.0
        %1319 = vmatpush1.msra.mxu0 0.0
        %1320 = vmatprep.subr.mxu0 0.0
        %1321 = vmatpush1.msra.mxu0 0.0
        %1322 = vmatprep.subr.mxu0 0.0
        %1323 = vmatpush1.msra.mxu0 0.0
        %1324 = vmatprep.subr.mxu0 0.0
        %1325 = vmatpush1.msra.mxu0 0.0
        %1326 = vmatprep.subr.mxu0 0.0
        %1327 = vmatpush1.msra.mxu0 0.0
        %1328 = vmatprep.mubr.f32.mxu0 0.0
        %1329 = vmatmul.mubr.f32.gmra.mrb[0].mxu0 %v1256
        %v1330 = vpop.f32.mrb[0].mxu0
        %v1331 = vadd.f32 0.0, %v1330
        %v1332 = vpop.f32.mrb[0].mxu0
        %1333 = vmatprep.mubr.f32.mxu0 0.0
        %1334 = vmatmul.mubr.f32.gmra.mrb[0].mxu0 %v1259
        %v1335 = vpop.f32.mrb[0].mxu0
        %v1336 = vadd.f32 0.0, %v1335
        %v1337 = vpop.f32.mrb[0].mxu0
        %1338 = vmatprep.mubr.f32.mxu0 0.0
        %1339 = vmatmul.mubr.f32.gmra.mrb[0].mxu0 %v1262
        %v1340 = vpop.f32.mrb[0].mxu0
        %v1341 = vadd.f32 0.0, %v1340
        %v1342 = vpop.f32.mrb[0].mxu0
        %1343 = vdwg.mxu0
        %v1345 = vsel %vm602, %v1331, 0
        %1347 = vmatprep.subr.mxu0 0.0
        %1348 = vmatpush1.msra.mxu0 %v504
        %1349 = vmatprep.subr.mxu0 0.0
        %1350 = vmatpush1.msra.mxu0 %v505
        %1351 = vmatprep.subr.mxu0 0.0
        %1352 = vmatpush1.msra.mxu0 0.0
        %1353 = vmatprep.subr.mxu0 0.0
        %1354 = vmatpush1.msra.mxu0 0.0
        %1355 = vmatprep.subr.mxu0 0.0
        %1356 = vmatpush1.msra.mxu0 0.0
        %1357 = vmatprep.subr.mxu0 0.0
        %1358 = vmatpush1.msra.mxu0 0.0
        %1359 = vmatprep.subr.mxu0 0.0
        %1360 = vmatpush1.msra.mxu0 0.0
        %1361 = vmatprep.subr.mxu0 0.0
        %1362 = vmatpush1.msra.mxu0 0.0
        %1363 = vmatprep.subr.mxu0 0.0
        %1364 = vmatpush1.msra.mxu0 0.0
        %1365 = vmatprep.subr.mxu0 0.0
        %1366 = vmatpush1.msra.mxu0 0.0
        %1367 = vmatprep.subr.mxu0 0.0
        %1368 = vmatpush1.msra.mxu0 0.0
        %1369 = vmatprep.subr.mxu0 0.0
        %1370 = vmatpush1.msra.mxu0 0.0
        %1371 = vmatprep.subr.mxu0 0.0
        %1372 = vmatpush1.msra.mxu0 0.0
        %1373 = vmatprep.subr.mxu0 0.0
        %1374 = vmatpush1.msra.mxu0 0.0
        %1375 = vmatprep.subr.mxu0 0.0
        %1376 = vmatpush1.msra.mxu0 0.0
        %1377 = vmatprep.subr.mxu0 0.0
        %1378 = vmatpush1.msra.mxu0 0.0
        %1379 = vmatprep.subr.mxu0 0.0
        %1380 = vmatpush1.msra.mxu0 0.0
        %1381 = vmatprep.subr.mxu0 0.0
        %1382 = vmatpush1.msra.mxu0 0.0
        %1383 = vmatprep.subr.mxu0 0.0
        %1384 = vmatpush1.msra.mxu0 0.0
        %1385 = vmatprep.subr.mxu0 0.0
        %1386 = vmatpush1.msra.mxu0 0.0
        %1387 = vmatprep.subr.mxu0 0.0
        %1388 = vmatpush1.msra.mxu0 0.0
        %1389 = vmatprep.subr.mxu0 0.0
        %1390 = vmatpush1.msra.mxu0 0.0
        %1391 = vmatprep.subr.mxu0 0.0
        %1392 = vmatpush1.msra.mxu0 0.0
        %1393 = vmatprep.subr.mxu0 0.0
        %1394 = vmatpush1.msra.mxu0 0.0
        %1395 = vmatprep.subr.mxu0 0.0
        %1396 = vmatpush1.msra.mxu0 0.0
        %1397 = vmatprep.subr.mxu0 0.0
        %1398 = vmatpush1.msra.mxu0 0.0
        %1399 = vmatprep.subr.mxu0 0.0
        %1400 = vmatpush1.msra.mxu0 0.0
        %1401 = vmatprep.subr.mxu0 0.0
        %1402 = vmatpush1.msra.mxu0 0.0
        %1403 = vmatprep.subr.mxu0 0.0
        %1404 = vmatpush1.msra.mxu0 0.0
        %1405 = vmatprep.subr.mxu0 0.0
        %1406 = vmatpush1.msra.mxu0 0.0
        %1407 = vmatprep.subr.mxu0 0.0
        %1408 = vmatpush1.msra.mxu0 0.0
        %1409 = vmatprep.subr.mxu0 0.0
        %1410 = vmatpush1.msra.mxu0 0.0
        %1411 = vmatprep.mubr.f32.mxu0 0.0
        %1412 = vmatmul.mubr.f32.gmra.mrb[0].mxu0 %v1345
        %v1413 = vpop.f32.mrb[0].mxu0
        %v1414 = vadd.f32 %v1336, %v1413
        %v1415 = vpop.f32.mrb[0].mxu0
        %1416 = vdwg.mxu0
        %v1418 = vsel %vm602, %v1341, 0
        %1420 = vmatprep.subr.mxu0 0.0
        %1421 = vmatpush1.msra.mxu0 %v507
        %1422 = vmatprep.subr.mxu0 0.0
        %1423 = vmatpush1.msra.mxu0 %v508
        %1424 = vmatprep.subr.mxu0 0.0
        %1425 = vmatpush1.msra.mxu0 0.0
        %1426 = vmatprep.subr.mxu0 0.0
        %1427 = vmatpush1.msra.mxu0 0.0
        %1428 = vmatprep.subr.mxu0 0.0
        %1429 = vmatpush1.msra.mxu0 0.0
        %1430 = vmatprep.subr.mxu0 0.0
        %1431 = vmatpush1.msra.mxu0 0.0
        %1432 = vmatprep.subr.mxu0 0.0
        %1433 = vmatpush1.msra.mxu0 0.0
        %1434 = vmatprep.subr.mxu0 0.0
        %1435 = vmatpush1.msra.mxu0 0.0
        %1436 = vmatprep.subr.mxu0 0.0
        %1437 = vmatpush1.msra.mxu0 0.0
        %1438 = vmatprep.subr.mxu0 0.0
        %1439 = vmatpush1.msra.mxu0 0.0
        %1440 = vmatprep.subr.mxu0 0.0
        %1441 = vmatpush1.msra.mxu0 0.0
        %1442 = vmatprep.subr.mxu0 0.0
        %1443 = vmatpush1.msra.mxu0 0.0
        %1444 = vmatprep.subr.mxu0 0.0
        %1445 = vmatpush1.msra.mxu0 0.0
        %1446 = vmatprep.subr.mxu0 0.0
        %1447 = vmatpush1.msra.mxu0 0.0
        %1448 = vmatprep.subr.mxu0 0.0
        %1449 = vmatpush1.msra.mxu0 0.0
        %1450 = vmatprep.subr.mxu0 0.0
        %1451 = vmatpush1.msra.mxu0 0.0
        %1452 = vmatprep.subr.mxu0 0.0
        %1453 = vmatpush1.msra.mxu0 0.0
        %1454 = vmatprep.subr.mxu0 0.0
        %1455 = vmatpush1.msra.mxu0 0.0
        %1456 = vmatprep.subr.mxu0 0.0
        %1457 = vmatpush1.msra.mxu0 0.0
        %1458 = vmatprep.subr.mxu0 0.0
        %1459 = vmatpush1.msra.mxu0 0.0
        %1460 = vmatprep.subr.mxu0 0.0
        %1461 = vmatpush1.msra.mxu0 0.0
        %1462 = vmatprep.subr.mxu0 0.0
        %1463 = vmatpush1.msra.mxu0 0.0
        %1464 = vmatprep.subr.mxu0 0.0
        %1465 = vmatpush1.msra.mxu0 0.0
        %1466 = vmatprep.subr.mxu0 0.0
        %1467 = vmatpush1.msra.mxu0 0.0
        %1468 = vmatprep.subr.mxu0 0.0
        %1469 = vmatpush1.msra.mxu0 0.0
        %1470 = vmatprep.subr.mxu0 0.0
        %1471 = vmatpush1.msra.mxu0 0.0
        %1472 = vmatprep.subr.mxu0 0.0
        %1473 = vmatpush1.msra.mxu0 0.0
        %1474 = vmatprep.subr.mxu0 0.0
        %1475 = vmatpush1.msra.mxu0 0.0
        %1476 = vmatprep.subr.mxu0 0.0
        %1477 = vmatpush1.msra.mxu0 0.0
        %1478 = vmatprep.subr.mxu0 0.0
        %1479 = vmatpush1.msra.mxu0 0.0
        %1480 = vmatprep.subr.mxu0 0.0
        %1481 = vmatpush1.msra.mxu0 0.0
        %1482 = vmatprep.subr.mxu0 0.0
        %1483 = vmatpush1.msra.mxu0 0.0
        %1484 = vmatprep.mubr.f32.mxu0 0.0
        %1485 = vmatmul.mubr.f32.gmra.mrb[0].mxu0 %v1418
        %v1486 = vpop.f32.mrb[0].mxu0
        %v1487 = vadd.f32 0.0, %v1486
        %v1488 = vpop.f32.mrb[0].mxu0
        %1489 = vdwg.mxu0
        %v1490 = vadd.f32 %v1414, %v1487
        %1491 = vset.pattern.permute.xlu0 3
        %1492 = vperm.xlu0 %1491, %v750
        %v1493 = vpop.permute.xlu0 %1492
        %v1495 = vadd.f32 %v1490, %v1493
        %v1496 = vadd.f32 %v1495, %v1004
        %v1497 = vmax.f32 %v1496, 0.0
        %v1498 = vmul.f32 %v400, %v400
        %v1499 = vmul.f32 %v401, %v401
        %v1500 = vld [vmem:[%s2] sm:$0xff]
        %v1501 = vld [vmem:[%s2 + $0x8] sm:$0xff]
        %v1502 = vld [vmem:[%s2 + $0x10] sm:$0xff]
        %v1503 = vld [vmem:[%s2 + $0x18] sm:$0xff]
        %v1504 = vld [vmem:[%s2 + $0x20] sm:$0xff]
        %v1505 = vld [vmem:[%s2 + $0x28] sm:$0xff]
        %v1506 = vld [vmem:[%s2 + $0x30] sm:$0xff]
        %v1507 = vld [vmem:[%s2 + $0x38] sm:$0xff]
        %v1508 = vld [vmem:[%s2 + $0x40] sm:$0xff]
        %v1509 = vld [vmem:[%s2 + $0x48] sm:$0xff]
        %v1510 = vld [vmem:[%s2 + $0x50] sm:$0xff]
        %v1511 = vld [vmem:[%s2 + $0x58] sm:$0xff]
        %v1512 = vld [vmem:[%s2 + $0x60] sm:$0xff]
        %v1513 = vld [vmem:[%s2 + $0x68] sm:$0xff]
        %v1514 = vld [vmem:[%s2 + $0x70] sm:$0xff]
        %v1515 = vld [vmem:[%s2 + $0x78] sm:$0xff]
        %v1516 = vld [vmem:[%s2 + $0x80] sm:$0xff]
        %v1517 = vld [vmem:[%s2 + $0x88] sm:$0xff]
        %v1518 = vld [vmem:[%s2 + $0x90] sm:$0xff]
        %v1519 = vld [vmem:[%s2 + $0x98] sm:$0xff]
        %v1520 = vld [vmem:[%s2 + $0xa0] sm:$0xff]
        %v1521 = vld [vmem:[%s2 + $0xa8] sm:$0xff]
        %v1522 = vld [vmem:[%s2 + $0xb0] sm:$0xff]
        %v1523 = vld [vmem:[%s2 + $0xb8] sm:$0xff]
        %v1524 = vld [vmem:[%s2 + $0xc0] sm:$0xff]
        %v1525 = vld [vmem:[%s2 + $0xc8] sm:$0xff]
        %v1526 = vld [vmem:[%s2 + $0xd0] sm:$0xff]
        %v1527 = vld [vmem:[%s2 + $0xd8] sm:$0xff]
        %v1528 = vld [vmem:[%s2 + $0xe0] sm:$0xff]
        %v1529 = vld [vmem:[%s2 + $0xe8] sm:$0xff]
        %v1530 = vld [vmem:[%s2 + $0xf0] sm:$0xff]
        %v1531 = vld [vmem:[%s2 + $0xf8] sm:$0xff]
        %1532 = vmatprep.subr.mxu0 0.0
        %1533 = vmatpush1.msra.mxu0 %v1500
        %1534 = vmatprep.subr.mxu0 0.0
        %1535 = vmatpush1.msra.mxu0 %v1501
        %1536 = vmatprep.subr.mxu0 0.0
        %1537 = vmatpush1.msra.mxu0 %v1502
        %1538 = vmatprep.subr.mxu0 0.0
        %1539 = vmatpush1.msra.mxu0 %v1503
        %1540 = vmatprep.subr.mxu0 0.0
        %1541 = vmatpush1.msra.mxu0 %v1504
        %1542 = vmatprep.subr.mxu0 0.0
        %1543 = vmatpush1.msra.mxu0 %v1505
        %1544 = vmatprep.subr.mxu0 0.0
        %1545 = vmatpush1.msra.mxu0 %v1506
        %1546 = vmatprep.subr.mxu0 0.0
        %1547 = vmatpush1.msra.mxu0 %v1507
        %1548 = vmatprep.subr.mxu0 0.0
        %1549 = vmatpush1.msra.mxu0 %v1508
        %1550 = vmatprep.subr.mxu0 0.0
        %1551 = vmatpush1.msra.mxu0 %v1509
        %1552 = vmatprep.subr.mxu0 0.0
        %1553 = vmatpush1.msra.mxu0 %v1510
        %1554 = vmatprep.subr.mxu0 0.0
        %1555 = vmatpush1.msra.mxu0 %v1511
        %1556 = vmatprep.subr.mxu0 0.0
        %1557 = vmatpush1.msra.mxu0 %v1512
        %1558 = vmatprep.subr.mxu0 0.0
        %1559 = vmatpush1.msra.mxu0 %v1513
        %1560 = vmatprep.subr.mxu0 0.0
        %1561 = vmatpush1.msra.mxu0 %v1514
        %1562 = vmatprep.subr.mxu0 0.0
        %1563 = vmatpush1.msra.mxu0 %v1515
        %1564 = vmatprep.subr.mxu0 0.0
        %1565 = vmatpush1.msra.mxu0 %v1516
        %1566 = vmatprep.subr.mxu0 0.0
        %1567 = vmatpush1.msra.mxu0 %v1517
        %1568 = vmatprep.subr.mxu0 0.0
        %1569 = vmatpush1.msra.mxu0 %v1518
        %1570 = vmatprep.subr.mxu0 0.0
        %1571 = vmatpush1.msra.mxu0 %v1519
        %1572 = vmatprep.subr.mxu0 0.0
        %1573 = vmatpush1.msra.mxu0 %v1520
        %1574 = vmatprep.subr.mxu0 0.0
        %1575 = vmatpush1.msra.mxu0 %v1521
        %1576 = vmatprep.subr.mxu0 0.0
        %1577 = vmatpush1.msra.mxu0 %v1522
        %1578 = vmatprep.subr.mxu0 0.0
        %1579 = vmatpush1.msra.mxu0 %v1523
        %1580 = vmatprep.subr.mxu0 0.0
        %1581 = vmatpush1.msra.mxu0 %v1524
        %1582 = vmatprep.subr.mxu0 0.0
        %1583 = vmatpush1.msra.mxu0 %v1525
        %1584 = vmatprep.subr.mxu0 0.0
        %1585 = vmatpush1.msra.mxu0 %v1526
        %1586 = vmatprep.subr.mxu0 0.0
        %1587 = vmatpush1.msra.mxu0 %v1527
        %1588 = vmatprep.subr.mxu0 0.0
        %1589 = vmatpush1.msra.mxu0 %v1528
        %1590 = vmatprep.subr.mxu0 0.0
        %1591 = vmatpush1.msra.mxu0 %v1529
        %1592 = vmatprep.subr.mxu0 0.0
        %1593 = vmatpush1.msra.mxu0 %v1530
        %1594 = vmatprep.subr.mxu0 0.0
        %1595 = vmatpush1.msra.mxu0 %v1531
        %1596 = vmatprep.mubr.f32.mxu0 %v1499
        %1597 = vmatmul.mubr.f32.gmra.mrb[0].mxu0 %v1498
        %v1598 = vpop.f32.mrb[0].mxu0
        %v1599 = vadd.f32 0.0, %v1598
        %v1600 = vpop.f32.mrb[0].mxu0
        %1601 = vdwg.mxu0
        %v1602 = vmul.f32 %v1599, -0.85
        %v1603 = vmul.f32 %v1602, 1.442695
        %v1604 = vpow.pop %v1603
        %v1605 = vmul.f32 %v1604, 6.2831855
        %v1606 = vld [vmem:[%s3] sm:$0xff]
        %v1607 = vld [vmem:[%s3 + $0x8] sm:$0xff]
        %v1608 = vld [vmem:[%s3 + $0x10] sm:$0xff]
        %v1609 = vld [vmem:[%s3 + $0x18] sm:$0xff]
        %v1611 = vsel %vm602, %v1497, 0
        %1613 = vmatprep.subr.mxu0 %v1607
        %1614 = vmatpush1.msra.mxu0 %v1606
        %1615 = vmatprep.subr.mxu0 %v1609
        %1616 = vmatpush1.msra.mxu0 %v1608
        %1617 = vmatprep.subr.mxu0 0.0
        %1618 = vmatpush1.msra.mxu0 0.0
        %1619 = vmatprep.subr.mxu0 0.0
        %1620 = vmatpush1.msra.mxu0 0.0
        %1621 = vmatprep.subr.mxu0 0.0
        %1622 = vmatpush1.msra.mxu0 0.0
        %1623 = vmatprep.subr.mxu0 0.0
        %1624 = vmatpush1.msra.mxu0 0.0
        %1625 = vmatprep.subr.mxu0 0.0
        %1626 = vmatpush1.msra.mxu0 0.0
        %1627 = vmatprep.subr.mxu0 0.0
        %1628 = vmatpush1.msra.mxu0 0.0
        %1629 = vmatprep.subr.mxu0 0.0
        %1630 = vmatpush1.msra.mxu0 0.0
        %1631 = vmatprep.subr.mxu0 0.0
        %1632 = vmatpush1.msra.mxu0 0.0
        %1633 = vmatprep.subr.mxu0 0.0
        %1634 = vmatpush1.msra.mxu0 0.0
        %1635 = vmatprep.subr.mxu0 0.0
        %1636 = vmatpush1.msra.mxu0 0.0
        %1637 = vmatprep.subr.mxu0 0.0
        %1638 = vmatpush1.msra.mxu0 0.0
        %1639 = vmatprep.subr.mxu0 0.0
        %1640 = vmatpush1.msra.mxu0 0.0
        %1641 = vmatprep.subr.mxu0 0.0
        %1642 = vmatpush1.msra.mxu0 0.0
        %1643 = vmatprep.subr.mxu0 0.0
        %1644 = vmatpush1.msra.mxu0 0.0
        %1645 = vmatprep.subr.mxu0 0.0
        %1646 = vmatpush1.msra.mxu0 0.0
        %1647 = vmatprep.subr.mxu0 0.0
        %1648 = vmatpush1.msra.mxu0 0.0
        %1649 = vmatprep.subr.mxu0 0.0
        %1650 = vmatpush1.msra.mxu0 0.0
        %1651 = vmatprep.subr.mxu0 0.0
        %1652 = vmatpush1.msra.mxu0 0.0
        %1653 = vmatprep.subr.mxu0 0.0
        %1654 = vmatpush1.msra.mxu0 0.0
        %1655 = vmatprep.subr.mxu0 0.0
        %1656 = vmatpush1.msra.mxu0 0.0
        %1657 = vmatprep.subr.mxu0 0.0
        %1658 = vmatpush1.msra.mxu0 0.0
        %1659 = vmatprep.subr.mxu0 0.0
        %1660 = vmatpush1.msra.mxu0 0.0
        %1661 = vmatprep.subr.mxu0 0.0
        %1662 = vmatpush1.msra.mxu0 0.0
        %1663 = vmatprep.subr.mxu0 0.0
        %1664 = vmatpush1.msra.mxu0 0.0
        %1665 = vmatprep.subr.mxu0 0.0
        %1666 = vmatpush1.msra.mxu0 0.0
        %1667 = vmatprep.subr.mxu0 0.0
        %1668 = vmatpush1.msra.mxu0 0.0
        %1669 = vmatprep.subr.mxu0 0.0
        %1670 = vmatpush1.msra.mxu0 0.0
        %1671 = vmatprep.subr.mxu0 0.0
        %1672 = vmatpush1.msra.mxu0 0.0
        %1673 = vmatprep.subr.mxu0 0.0
        %1674 = vmatpush1.msra.mxu0 0.0
        %1675 = vmatprep.subr.mxu0 0.0
        %1676 = vmatpush1.msra.mxu0 0.0
        %1677 = vmatprep.mubr.f32.mxu0 0.0
        %1678 = vmatmul.mubr.f32.gmra.mrb[0].mxu0 %v1611
        %v1679 = vpop.f32.mrb[0].mxu0
        %v1680 = vadd.f32 0.0, %v1679
        %v1681 = vpop.f32.mrb[0].mxu0
        %v1682 = vadd.f32 0.0, %v1681
        %1683 = vdwg.mxu0
        %v1684 = vld [vmem:[%s4] sm:$0xff]
        %v1685 = vld [vmem:[%s4 + $0x8] sm:$0xff]
        %v1686 = vld [vmem:[%s4 + $0x10] sm:$0xff]
        %v1687 = vld [vmem:[%s4 + $0x18] sm:$0xff]
        %v1689 = vsel %vm602, %v1605, 0
        %1691 = vmatprep.subr.mxu0 %v1685
        %1692 = vmatpush1.msra.mxu0 %v1684
        %1693 = vmatprep.subr.mxu0 %v1687
        %1694 = vmatpush1.msra.mxu0 %v1686
        %1695 = vmatprep.subr.mxu0 0.0
        %1696 = vmatpush1.msra.mxu0 0.0
        %1697 = vmatprep.subr.mxu0 0.0
        %1698 = vmatpush1.msra.mxu0 0.0
        %1699 = vmatprep.subr.mxu0 0.0
        %1700 = vmatpush1.msra.mxu0 0.0
        %1701 = vmatprep.subr.mxu0 0.0
        %1702 = vmatpush1.msra.mxu0 0.0
        %1703 = vmatprep.subr.mxu0 0.0
        %1704 = vmatpush1.msra.mxu0 0.0
        %1705 = vmatprep.subr.mxu0 0.0
        %1706 = vmatpush1.msra.mxu0 0.0
        %1707 = vmatprep.subr.mxu0 0.0
        %1708 = vmatpush1.msra.mxu0 0.0
        %1709 = vmatprep.subr.mxu0 0.0
        %1710 = vmatpush1.msra.mxu0 0.0
        %1711 = vmatprep.subr.mxu0 0.0
        %1712 = vmatpush1.msra.mxu0 0.0
        %1713 = vmatprep.subr.mxu0 0.0
        %1714 = vmatpush1.msra.mxu0 0.0
        %1715 = vmatprep.subr.mxu0 0.0
        %1716 = vmatpush1.msra.mxu0 0.0
        %1717 = vmatprep.subr.mxu0 0.0
        %1718 = vmatpush1.msra.mxu0 0.0
        %1719 = vmatprep.subr.mxu0 0.0
        %1720 = vmatpush1.msra.mxu0 0.0
        %1721 = vmatprep.subr.mxu0 0.0
        %1722 = vmatpush1.msra.mxu0 0.0
        %1723 = vmatprep.subr.mxu0 0.0
        %1724 = vmatpush1.msra.mxu0 0.0
        %1725 = vmatprep.subr.mxu0 0.0
        %1726 = vmatpush1.msra.mxu0 0.0
        %1727 = vmatprep.subr.mxu0 0.0
        %1728 = vmatpush1.msra.mxu0 0.0
        %1729 = vmatprep.subr.mxu0 0.0
        %1730 = vmatpush1.msra.mxu0 0.0
        %1731 = vmatprep.subr.mxu0 0.0
        %1732 = vmatpush1.msra.mxu0 0.0
        %1733 = vmatprep.subr.mxu0 0.0
        %1734 = vmatpush1.msra.mxu0 0.0
        %1735 = vmatprep.subr.mxu0 0.0
        %1736 = vmatpush1.msra.mxu0 0.0
        %1737 = vmatprep.subr.mxu0 0.0
        %1738 = vmatpush1.msra.mxu0 0.0
        %1739 = vmatprep.subr.mxu0 0.0
        %1740 = vmatpush1.msra.mxu0 0.0
        %1741 = vmatprep.subr.mxu0 0.0
        %1742 = vmatpush1.msra.mxu0 0.0
        %1743 = vmatprep.subr.mxu0 0.0
        %1744 = vmatpush1.msra.mxu0 0.0
        %1745 = vmatprep.subr.mxu0 0.0
        %1746 = vmatpush1.msra.mxu0 0.0
        %1747 = vmatprep.subr.mxu0 0.0
        %1748 = vmatpush1.msra.mxu0 0.0
        %1749 = vmatprep.subr.mxu0 0.0
        %1750 = vmatpush1.msra.mxu0 0.0
        %1751 = vmatprep.subr.mxu0 0.0
        %1752 = vmatpush1.msra.mxu0 0.0
        %1753 = vmatprep.subr.mxu0 0.0
        %1754 = vmatpush1.msra.mxu0 0.0
        %1755 = vmatprep.mubr.f32.mxu0 0.0
        %1756 = vmatmul.mubr.f32.gmra.mrb[0].mxu0 %v1689
        %v1757 = vpop.f32.mrb[0].mxu0
        %v1758 = vadd.f32 0.0, %v1757
        %v1759 = vpop.f32.mrb[0].mxu0
        %v1760 = vadd.f32 0.0, %v1759
        %1761 = vdwg.mxu0
        %v1762 = vmul.f32 %v1680, %v1758
        %v1763 = vmul.f32 %v1682, %v1760
        %v1764 = vtanh.pop %v1762
        %v1765 = vtanh.pop %v1763
        %v1766 = vmax.f32 %v1764, %v1765
        %1767 = vmax.xlane.f32.xlu0 %v1766
        %v1768 = vpop.xlane.xlu0 %1767
        %v1769 = vadd.f32 %v1764, %v1765
        %1770 = vadd.xlane.f32.xlu0 %v1769
        %v1771 = vpop.xlane.xlu0 %1770
        %v1772 = vrcp.pop 256.0
        %v1773 = vmul.f32 %v1771, %v1772
        %vm1774 = vcmask 7168
        %v1775 = vsel %vm1774, %v1768, %v1773
        %v1776 = vld [vmem:[%s8] sm:$0x3]
        %v1778 = vsel %vm512, %v1776, 0
        %1780 = vmatprep.subr.mxu0 0.0
        %1781 = vmatpush1.msra.mxu0 %v1775
        %1782 = vmatprep.subr.mxu0 0.0
        %1783 = vmatpush1.msra.mxu0 0.0
        %1784 = vmatprep.subr.mxu0 0.0
        %1785 = vmatpush1.msra.mxu0 0.0
        %1786 = vmatprep.subr.mxu0 0.0
        %1787 = vmatpush1.msra.mxu0 0.0
        %1788 = vmatprep.subr.mxu0 0.0
        %1789 = vmatpush1.msra.mxu0 0.0
        %1790 = vmatprep.subr.mxu0 0.0
        %1791 = vmatpush1.msra.mxu0 0.0
        %1792 = vmatprep.subr.mxu0 0.0
        %1793 = vmatpush1.msra.mxu0 0.0
        %1794 = vmatprep.subr.mxu0 0.0
        %1795 = vmatpush1.msra.mxu0 0.0
        %1796 = vmatprep.subr.mxu0 0.0
        %1797 = vmatpush1.msra.mxu0 0.0
        %1798 = vmatprep.subr.mxu0 0.0
        %1799 = vmatpush1.msra.mxu0 0.0
        %1800 = vmatprep.subr.mxu0 0.0
        %1801 = vmatpush1.msra.mxu0 0.0
        %1802 = vmatprep.subr.mxu0 0.0
        %1803 = vmatpush1.msra.mxu0 0.0
        %1804 = vmatprep.subr.mxu0 0.0
        %1805 = vmatpush1.msra.mxu0 0.0
        %1806 = vmatprep.subr.mxu0 0.0
        %1807 = vmatpush1.msra.mxu0 0.0
        %1808 = vmatprep.subr.mxu0 0.0
        %1809 = vmatpush1.msra.mxu0 0.0
        %1810 = vmatprep.subr.mxu0 0.0
        %1811 = vmatpush1.msra.mxu0 0.0
        %1812 = vmatprep.subr.mxu0 0.0
        %1813 = vmatpush1.msra.mxu0 0.0
        %1814 = vmatprep.subr.mxu0 0.0
        %1815 = vmatpush1.msra.mxu0 0.0
        %1816 = vmatprep.subr.mxu0 0.0
        %1817 = vmatpush1.msra.mxu0 0.0
        %1818 = vmatprep.subr.mxu0 0.0
        %1819 = vmatpush1.msra.mxu0 0.0
        %1820 = vmatprep.subr.mxu0 0.0
        %1821 = vmatpush1.msra.mxu0 0.0
        %1822 = vmatprep.subr.mxu0 0.0
        %1823 = vmatpush1.msra.mxu0 0.0
        %1824 = vmatprep.subr.mxu0 0.0
        %1825 = vmatpush1.msra.mxu0 0.0
        %1826 = vmatprep.subr.mxu0 0.0
        %1827 = vmatpush1.msra.mxu0 0.0
        %1828 = vmatprep.subr.mxu0 0.0
        %1829 = vmatpush1.msra.mxu0 0.0
        %1830 = vmatprep.subr.mxu0 0.0
        %1831 = vmatpush1.msra.mxu0 0.0
        %1832 = vmatprep.subr.mxu0 0.0
        %1833 = vmatpush1.msra.mxu0 0.0
        %1834 = vmatprep.subr.mxu0 0.0
        %1835 = vmatpush1.msra.mxu0 0.0
        %1836 = vmatprep.subr.mxu0 0.0
        %1837 = vmatpush1.msra.mxu0 0.0
        %1838 = vmatprep.subr.mxu0 0.0
        %1839 = vmatpush1.msra.mxu0 0.0
        %1840 = vmatprep.subr.mxu0 0.0
        %1841 = vmatpush1.msra.mxu0 0.0
        %1842 = vmatprep.subr.mxu0 0.0
        %1843 = vmatpush1.msra.mxu0 0.0
        %1844 = vmatprep.mubr.f32.mxu0 0.0
        %1845 = vmatmul.mubr.f32.gmra.mrb[0].mxu0 %v1778
        %v1846 = vpop.f32.mrb[0].mxu0
        %v1847 = vadd.f32 0.0, %v1846
        %v1848 = vpop.f32.mrb[0].mxu0
        %1849 = vdwg.mxu0
        %v1850 = vmax.f32 %v1847, 0.0
        %v1851 = vld [vmem:[%s9] sm:$0xff]
        %vm1852 = vcmask 15360
        %v1854 = vsel %vm1852, %v1851, 0
        %vm1856 = vcmask 1041408
        %v1858 = vsel %vm1856, %v1850, 0
        %1860 = vmatprep.subr.mxu0 0.0
        %1861 = vmatpush1.msra.mxu0 %v1858
        %1862 = vmatprep.subr.mxu0 0.0
        %1863 = vmatpush1.msra.mxu0 0.0
        %1864 = vmatprep.subr.mxu0 0.0
        %1865 = vmatpush1.msra.mxu0 0.0
        %1866 = vmatprep.subr.mxu0 0.0
        %1867 = vmatpush1.msra.mxu0 0.0
        %1868 = vmatprep.subr.mxu0 0.0
        %1869 = vmatpush1.msra.mxu0 0.0
        %1870 = vmatprep.subr.mxu0 0.0
        %1871 = vmatpush1.msra.mxu0 0.0
        %1872 = vmatprep.subr.mxu0 0.0
        %1873 = vmatpush1.msra.mxu0 0.0
        %1874 = vmatprep.subr.mxu0 0.0
        %1875 = vmatpush1.msra.mxu0 0.0
        %1876 = vmatprep.subr.mxu0 0.0
        %1877 = vmatpush1.msra.mxu0 0.0
        %1878 = vmatprep.subr.mxu0 0.0
        %1879 = vmatpush1.msra.mxu0 0.0
        %1880 = vmatprep.subr.mxu0 0.0
        %1881 = vmatpush1.msra.mxu0 0.0
        %1882 = vmatprep.subr.mxu0 0.0
        %1883 = vmatpush1.msra.mxu0 0.0
        %1884 = vmatprep.subr.mxu0 0.0
        %1885 = vmatpush1.msra.mxu0 0.0
        %1886 = vmatprep.subr.mxu0 0.0
        %1887 = vmatpush1.msra.mxu0 0.0
        %1888 = vmatprep.subr.mxu0 0.0
        %1889 = vmatpush1.msra.mxu0 0.0
        %1890 = vmatprep.subr.mxu0 0.0
        %1891 = vmatpush1.msra.mxu0 0.0
        %1892 = vmatprep.subr.mxu0 0.0
        %1893 = vmatpush1.msra.mxu0 0.0
        %1894 = vmatprep.subr.mxu0 0.0
        %1895 = vmatpush1.msra.mxu0 0.0
        %1896 = vmatprep.subr.mxu0 0.0
        %1897 = vmatpush1.msra.mxu0 0.0
        %1898 = vmatprep.subr.mxu0 0.0
        %1899 = vmatpush1.msra.mxu0 0.0
        %1900 = vmatprep.subr.mxu0 0.0
        %1901 = vmatpush1.msra.mxu0 0.0
        %1902 = vmatprep.subr.mxu0 0.0
        %1903 = vmatpush1.msra.mxu0 0.0
        %1904 = vmatprep.subr.mxu0 0.0
        %1905 = vmatpush1.msra.mxu0 0.0
        %1906 = vmatprep.subr.mxu0 0.0
        %1907 = vmatpush1.msra.mxu0 0.0
        %1908 = vmatprep.subr.mxu0 0.0
        %1909 = vmatpush1.msra.mxu0 0.0
        %1910 = vmatprep.subr.mxu0 0.0
        %1911 = vmatpush1.msra.mxu0 0.0
        %1912 = vmatprep.subr.mxu0 0.0
        %1913 = vmatpush1.msra.mxu0 0.0
        %1914 = vmatprep.subr.mxu0 0.0
        %1915 = vmatpush1.msra.mxu0 0.0
        %1916 = vmatprep.subr.mxu0 0.0
        %1917 = vmatpush1.msra.mxu0 0.0
        %1918 = vmatprep.subr.mxu0 0.0
        %1919 = vmatpush1.msra.mxu0 0.0
        %1920 = vmatprep.subr.mxu0 0.0
        %1921 = vmatpush1.msra.mxu0 0.0
        %1922 = vmatprep.subr.mxu0 0.0
        %1923 = vmatpush1.msra.mxu0 0.0
        %1924 = vmatprep.mubr.f32.mxu0 0.0
        %1925 = vmatmul.mubr.f32.gmra.mrb[0].mxu0 %v1854
        %v1926 = vpop.f32.mrb[0].mxu0
        %v1927 = vadd.f32 0.0, %v1926
        %v1928 = vpop.f32.mrb[0].mxu0
        %1929 = vdwg.mxu0
        %1931 = vrot.lane.b32.xlu0 %v1927, 127
        %v1932 = vpop.permute.xlu0 %1931
        %v1934 = vadd.f32 %v1927, %v1932
        %v1935 = vxor.u32 %v1934, 2147483648
        %v1936 = vmul.f32 %v1935, 1.442695
        %v1937 = vpow.pop %v1936
        %v1938 = vadd.f32 %v1937, 1.0
        %v1939 = vrcp.pop %v1938
        %v1940 = vmul.f32 1.0, %v1939
        %1942 = vset.pattern.permute.xlu0 0
        %1943 = vperm.xlu0 %1942, %v1940
        %v1944 = vpop.permute.xlu0 %1943
        %v1946 = vmul.f32 %v1764, %v1944
        %v1947 = vmul.f32 %v1765, %v1944
        %v1948 = vrot.slane %v1946, 4
        %v1949 = vmax.f32 %v1946, %v1948
        %v1950 = vrot.slane %v1949, 2
        %v1951 = vmax.f32 %v1949, %v1950
        %v1952 = vrot.slane %v1951, 1
        %v1953 = vmax.f32 %v1951, %v1952
        %v1954 = vrot.slane %v1947, 4
        %v1955 = vmax.f32 %v1947, %v1954
        %v1956 = vrot.slane %v1955, 2
        %v1957 = vmax.f32 %v1955, %v1956
        %v1958 = vrot.slane %v1957, 1
        %v1959 = vmax.f32 %v1957, %v1958
        %v1960 = vrot.slane %v1946, 4
        %v1961 = vadd.f32 %v1946, %v1960
        %v1962 = vrot.slane %v1961, 2
        %v1963 = vadd.f32 %v1961, %v1962
        %v1964 = vrot.slane %v1963, 1
        %v1965 = vadd.f32 %v1963, %v1964
        %v1966 = vrot.slane %v1947, 4
        %v1967 = vadd.f32 %v1947, %v1966
        %v1968 = vrot.slane %v1967, 2
        %v1969 = vadd.f32 %v1967, %v1968
        %v1970 = vrot.slane %v1969, 1
        %v1971 = vadd.f32 %v1969, %v1970
        %v1972 = vrcp.pop 8.0
        %v1973 = vmul.f32 %v1965, %v1972
        %v1974 = vmul.f32 %v1971, %v1972
        %v1975 = vld [vmem:[#allocation2] sm:$0xff]
        %v1976 = vld [vmem:[#allocation2 + $0x8] sm:$0xff]
        %v1977 = vld [vmem:[#allocation2 + $0x10] sm:$0xff]
        %v1978 = vld [vmem:[#allocation2 + $0x18] sm:$0xff]
        %v1979 = vld [vmem:[#allocation2 + $0x20] sm:$0xff]
        %v1980 = vld [vmem:[#allocation2 + $0x28] sm:$0xff]
        %v1981 = vld [vmem:[#allocation2 + $0x30] sm:$0xff]
        %v1982 = vld [vmem:[#allocation2 + $0x38] sm:$0xff]
        %v1983 = vld [vmem:[#allocation2 + $0x40] sm:$0xff]
        %v1984 = vld [vmem:[#allocation2 + $0x48] sm:$0xff]
        %v1985 = vld [vmem:[#allocation2 + $0x50] sm:$0xff]
        %v1986 = vld [vmem:[#allocation2 + $0x58] sm:$0xff]
        %v1987 = vld [vmem:[#allocation2 + $0x60] sm:$0xff]
        %v1988 = vld [vmem:[#allocation2 + $0x68] sm:$0xff]
        %v1989 = vld [vmem:[#allocation2 + $0x70] sm:$0xff]
        %v1990 = vld [vmem:[#allocation2 + $0x78] sm:$0xff]
        %v1991 = vld [vmem:[#allocation2 + $0x80] sm:$0xff]
        %v1992 = vld [vmem:[#allocation2 + $0x88] sm:$0xff]
        %v1993 = vld [vmem:[#allocation2 + $0x90] sm:$0xff]
        %v1994 = vld [vmem:[#allocation2 + $0x98] sm:$0xff]
        %v1995 = vld [vmem:[#allocation2 + $0xa0] sm:$0xff]
        %v1996 = vld [vmem:[#allocation2 + $0xa8] sm:$0xff]
        %v1997 = vld [vmem:[#allocation2 + $0xb0] sm:$0xff]
        %v1998 = vld [vmem:[#allocation2 + $0xb8] sm:$0xff]
        %v1999 = vld [vmem:[#allocation2 + $0xc0] sm:$0xff]
        %v2000 = vld [vmem:[#allocation2 + $0xc8] sm:$0xff]
        %v2001 = vld [vmem:[#allocation2 + $0xd0] sm:$0xff]
        %v2002 = vld [vmem:[#allocation2 + $0xd8] sm:$0xff]
        %v2003 = vld [vmem:[#allocation2 + $0xe0] sm:$0xff]
        %v2004 = vld [vmem:[#allocation2 + $0xe8] sm:$0xff]
        %v2005 = vld [vmem:[#allocation2 + $0xf0] sm:$0xff]
        %v2006 = vld [vmem:[#allocation2 + $0xf8] sm:$0xff]
        %v2007 = vld [vmem:[#allocation2 + $0x100] sm:$0xff]
        %v2008 = vld [vmem:[#allocation2 + $0x108] sm:$0xff]
        %v2009 = vld [vmem:[#allocation2 + $0x110] sm:$0xff]
        %v2010 = vld [vmem:[#allocation2 + $0x118] sm:$0xff]
        %v2011 = vld [vmem:[#allocation2 + $0x120] sm:$0xff]
        %v2012 = vld [vmem:[#allocation2 + $0x128] sm:$0xff]
        %v2013 = vld [vmem:[#allocation2 + $0x130] sm:$0xff]
        %v2014 = vld [vmem:[#allocation2 + $0x138] sm:$0xff]
        %v2015 = vld [vmem:[#allocation2 + $0x140] sm:$0xff]
        %v2016 = vld [vmem:[#allocation2 + $0x148] sm:$0xff]
        %v2017 = vld [vmem:[#allocation2 + $0x150] sm:$0xff]
        %v2018 = vld [vmem:[#allocation2 + $0x158] sm:$0xff]
        %v2019 = vld [vmem:[#allocation2 + $0x160] sm:$0xff]
        %v2020 = vld [vmem:[#allocation2 + $0x168] sm:$0xff]
        %v2021 = vld [vmem:[#allocation2 + $0x170] sm:$0xff]
        %v2022 = vld [vmem:[#allocation2 + $0x178] sm:$0xff]
        %v2023 = vld [vmem:[#allocation2 + $0x180] sm:$0xff]
        %v2024 = vld [vmem:[#allocation2 + $0x188] sm:$0xff]
        %v2025 = vld [vmem:[#allocation2 + $0x190] sm:$0xff]
        %v2026 = vld [vmem:[#allocation2 + $0x198] sm:$0xff]
        %v2027 = vld [vmem:[#allocation2 + $0x1a0] sm:$0xff]
        %v2028 = vld [vmem:[#allocation2 + $0x1a8] sm:$0xff]
        %v2029 = vld [vmem:[#allocation2 + $0x1b0] sm:$0xff]
        %v2030 = vld [vmem:[#allocation2 + $0x1b8] sm:$0xff]
        %v2031 = vld [vmem:[#allocation2 + $0x1c0] sm:$0xff]
        %v2032 = vld [vmem:[#allocation2 + $0x1c8] sm:$0xff]
        %v2033 = vld [vmem:[#allocation2 + $0x1d0] sm:$0xff]
        %v2034 = vld [vmem:[#allocation2 + $0x1d8] sm:$0xff]
        %v2035 = vld [vmem:[#allocation2 + $0x1e0] sm:$0xff]
        %v2036 = vld [vmem:[#allocation2 + $0x1e8] sm:$0xff]
        %v2037 = vld [vmem:[#allocation2 + $0x1f0] sm:$0xff]
        %v2038 = vld [vmem:[#allocation2 + $0x1f8] sm:$0xff]
        %s2039 = scalar_lea.vmem [#allocation2], 512
        %v2040 = vld [vmem:[%s2039] sm:$0xff]
        %v2041 = vld [vmem:[%s2039 + $0x8] sm:$0xff]
        %v2042 = vld [vmem:[%s2039 + $0x10] sm:$0xff]
        %v2043 = vld [vmem:[%s2039 + $0x18] sm:$0xff]
        %v2044 = vld [vmem:[%s2039 + $0x20] sm:$0xff]
        %v2045 = vld [vmem:[%s2039 + $0x28] sm:$0xff]
        %v2046 = vld [vmem:[%s2039 + $0x30] sm:$0xff]
        %v2047 = vld [vmem:[%s2039 + $0x38] sm:$0xff]
        %v2048 = vld [vmem:[%s2039 + $0x40] sm:$0xff]
        %v2049 = vld [vmem:[%s2039 + $0x48] sm:$0xff]
        %v2050 = vld [vmem:[%s2039 + $0x50] sm:$0xff]
        %v2051 = vld [vmem:[%s2039 + $0x58] sm:$0xff]
        %v2052 = vld [vmem:[%s2039 + $0x60] sm:$0xff]
        %v2053 = vld [vmem:[%s2039 + $0x68] sm:$0xff]
        %v2054 = vld [vmem:[%s2039 + $0x70] sm:$0xff]
        %v2055 = vld [vmem:[%s2039 + $0x78] sm:$0xff]
        %v2056 = vld [vmem:[%s2039 + $0x80] sm:$0xff]
        %v2057 = vld [vmem:[%s2039 + $0x88] sm:$0xff]
        %v2058 = vld [vmem:[%s2039 + $0x90] sm:$0xff]
        %v2059 = vld [vmem:[%s2039 + $0x98] sm:$0xff]
        %v2060 = vld [vmem:[%s2039 + $0xa0] sm:$0xff]
        %v2061 = vld [vmem:[%s2039 + $0xa8] sm:$0xff]
        %v2062 = vld [vmem:[%s2039 + $0xb0] sm:$0xff]
        %v2063 = vld [vmem:[%s2039 + $0xb8] sm:$0xff]
        %v2064 = vld [vmem:[%s2039 + $0xc0] sm:$0xff]
        %v2065 = vld [vmem:[%s2039 + $0xc8] sm:$0xff]
        %v2066 = vld [vmem:[%s2039 + $0xd0] sm:$0xff]
        %v2067 = vld [vmem:[%s2039 + $0xd8] sm:$0xff]
        %v2068 = vld [vmem:[%s2039 + $0xe0] sm:$0xff]
        %v2069 = vld [vmem:[%s2039 + $0xe8] sm:$0xff]
        %v2070 = vld [vmem:[%s2039 + $0xf0] sm:$0xff]
        %v2071 = vld [vmem:[%s2039 + $0xf8] sm:$0xff]
        %v2072 = vld [vmem:[%s2039 + $0x100] sm:$0xff]
        %v2073 = vld [vmem:[%s2039 + $0x108] sm:$0xff]
        %v2074 = vld [vmem:[%s2039 + $0x110] sm:$0xff]
        %v2075 = vld [vmem:[%s2039 + $0x118] sm:$0xff]
        %v2076 = vld [vmem:[%s2039 + $0x120] sm:$0xff]
        %v2077 = vld [vmem:[%s2039 + $0x128] sm:$0xff]
        %v2078 = vld [vmem:[%s2039 + $0x130] sm:$0xff]
        %v2079 = vld [vmem:[%s2039 + $0x138] sm:$0xff]
        %v2080 = vld [vmem:[%s2039 + $0x140] sm:$0xff]
        %v2081 = vld [vmem:[%s2039 + $0x148] sm:$0xff]
        %v2082 = vld [vmem:[%s2039 + $0x150] sm:$0xff]
        %v2083 = vld [vmem:[%s2039 + $0x158] sm:$0xff]
        %v2084 = vld [vmem:[%s2039 + $0x160] sm:$0xff]
        %v2085 = vld [vmem:[%s2039 + $0x168] sm:$0xff]
        %v2086 = vld [vmem:[%s2039 + $0x170] sm:$0xff]
        %v2087 = vld [vmem:[%s2039 + $0x178] sm:$0xff]
        %v2088 = vld [vmem:[%s2039 + $0x180] sm:$0xff]
        %v2089 = vld [vmem:[%s2039 + $0x188] sm:$0xff]
        %v2090 = vld [vmem:[%s2039 + $0x190] sm:$0xff]
        %v2091 = vld [vmem:[%s2039 + $0x198] sm:$0xff]
        %v2092 = vld [vmem:[%s2039 + $0x1a0] sm:$0xff]
        %v2093 = vld [vmem:[%s2039 + $0x1a8] sm:$0xff]
        %v2094 = vld [vmem:[%s2039 + $0x1b0] sm:$0xff]
        %v2095 = vld [vmem:[%s2039 + $0x1b8] sm:$0xff]
        %v2096 = vld [vmem:[%s2039 + $0x1c0] sm:$0xff]
        %v2097 = vld [vmem:[%s2039 + $0x1c8] sm:$0xff]
        %v2098 = vld [vmem:[%s2039 + $0x1d0] sm:$0xff]
        %v2099 = vld [vmem:[%s2039 + $0x1d8] sm:$0xff]
        %v2100 = vld [vmem:[%s2039 + $0x1e0] sm:$0xff]
        %v2101 = vld [vmem:[%s2039 + $0x1e8] sm:$0xff]
        %v2102 = vld [vmem:[%s2039 + $0x1f0] sm:$0xff]
        %v2103 = vld [vmem:[%s2039 + $0x1f8] sm:$0xff]
        %2104 = vmatprep.subr.mxu0 %v2041
        %2105 = vmatpush1.msra.mxu0 %v2040
        %2106 = vmatprep.subr.mxu0 %v2043
        %2107 = vmatpush1.msra.mxu0 %v2042
        %2108 = vmatprep.subr.mxu0 %v2045
        %2109 = vmatpush1.msra.mxu0 %v2044
        %2110 = vmatprep.subr.mxu0 %v2047
        %2111 = vmatpush1.msra.mxu0 %v2046
        %2112 = vmatprep.subr.mxu0 %v2049
        %2113 = vmatpush1.msra.mxu0 %v2048
        %2114 = vmatprep.subr.mxu0 %v2051
        %2115 = vmatpush1.msra.mxu0 %v2050
        %2116 = vmatprep.subr.mxu0 %v2053
        %2117 = vmatpush1.msra.mxu0 %v2052
        %2118 = vmatprep.subr.mxu0 %v2055
        %2119 = vmatpush1.msra.mxu0 %v2054
        %2120 = vmatprep.subr.mxu0 %v2057
        %2121 = vmatpush1.msra.mxu0 %v2056
        %2122 = vmatprep.subr.mxu0 %v2059
        %2123 = vmatpush1.msra.mxu0 %v2058
        %2124 = vmatprep.subr.mxu0 %v2061
        %2125 = vmatpush1.msra.mxu0 %v2060
        %2126 = vmatprep.subr.mxu0 %v2063
        %2127 = vmatpush1.msra.mxu0 %v2062
        %2128 = vmatprep.subr.mxu0 %v2065
        %2129 = vmatpush1.msra.mxu0 %v2064
        %2130 = vmatprep.subr.mxu0 %v2067
        %2131 = vmatpush1.msra.mxu0 %v2066
        %2132 = vmatprep.subr.mxu0 %v2069
        %2133 = vmatpush1.msra.mxu0 %v2068
        %2134 = vmatprep.subr.mxu0 %v2071
        %2135 = vmatpush1.msra.mxu0 %v2070
        %2136 = vmatprep.subr.mxu0 %v2073
        %2137 = vmatpush1.msra.mxu0 %v2072
        %2138 = vmatprep.subr.mxu0 %v2075
        %2139 = vmatpush1.msra.mxu0 %v2074
        %2140 = vmatprep.subr.mxu0 %v2077
        %2141 = vmatpush1.msra.mxu0 %v2076
        %2142 = vmatprep.subr.mxu0 %v2079
        %2143 = vmatpush1.msra.mxu0 %v2078
        %2144 = vmatprep.subr.mxu0 %v2081
        %2145 = vmatpush1.msra.mxu0 %v2080
        %2146 = vmatprep.subr.mxu0 %v2083
        %2147 = vmatpush1.msra.mxu0 %v2082
        %2148 = vmatprep.subr.mxu0 %v2085
        %2149 = vmatpush1.msra.mxu0 %v2084
        %2150 = vmatprep.subr.mxu0 %v2087
        %2151 = vmatpush1.msra.mxu0 %v2086
        %2152 = vmatprep.subr.mxu0 %v2089
        %2153 = vmatpush1.msra.mxu0 %v2088
        %2154 = vmatprep.subr.mxu0 %v2091
        %2155 = vmatpush1.msra.mxu0 %v2090
        %2156 = vmatprep.subr.mxu0 %v2093
        %2157 = vmatpush1.msra.mxu0 %v2092
        %2158 = vmatprep.subr.mxu0 %v2095
        %2159 = vmatpush1.msra.mxu0 %v2094
        %2160 = vmatprep.subr.mxu0 %v2097
        %2161 = vmatpush1.msra.mxu0 %v2096
        %2162 = vmatprep.subr.mxu0 %v2099
        %2163 = vmatpush1.msra.mxu0 %v2098
        %2164 = vmatprep.subr.mxu0 %v2101
        %2165 = vmatpush1.msra.mxu0 %v2100
        %2166 = vmatprep.subr.mxu0 %v2103
        %2167 = vmatpush1.msra.mxu0 %v2102
        %2168 = vmatprep.mubr.f32.mxu0 %v1974
        %2169 = vmatmul.mubr.f32.gmra.mrb[0].mxu0 %v1973
        %v2170 = vpop.f32.mrb[0].mxu0
        %v2171 = vadd.f32 0.0, %v2170
        %v2172 = vpop.f32.mrb[0].mxu0
        %v2173 = vadd.f32 0.0, %v2172
        %2174 = vdwg.mxu0
        %2175 = vmatprep.subr.mxu0 %v1976
        %2176 = vmatpush1.msra.mxu0 %v1975
        %2177 = vmatprep.subr.mxu0 %v1978
        %2178 = vmatpush1.msra.mxu0 %v1977
        %2179 = vmatprep.subr.mxu0 %v1980
        %2180 = vmatpush1.msra.mxu0 %v1979
        %2181 = vmatprep.subr.mxu0 %v1982
        %2182 = vmatpush1.msra.mxu0 %v1981
        %2183 = vmatprep.subr.mxu0 %v1984
        %2184 = vmatpush1.msra.mxu0 %v1983
        %2185 = vmatprep.subr.mxu0 %v1986
        %2186 = vmatpush1.msra.mxu0 %v1985
        %2187 = vmatprep.subr.mxu0 %v1988
        %2188 = vmatpush1.msra.mxu0 %v1987
        %2189 = vmatprep.subr.mxu0 %v1990
        %2190 = vmatpush1.msra.mxu0 %v1989
        %2191 = vmatprep.subr.mxu0 %v1992
        %2192 = vmatpush1.msra.mxu0 %v1991
        %2193 = vmatprep.subr.mxu0 %v1994
        %2194 = vmatpush1.msra.mxu0 %v1993
        %2195 = vmatprep.subr.mxu0 %v1996
        %2196 = vmatpush1.msra.mxu0 %v1995
        %2197 = vmatprep.subr.mxu0 %v1998
        %2198 = vmatpush1.msra.mxu0 %v1997
        %2199 = vmatprep.subr.mxu0 %v2000
        %2200 = vmatpush1.msra.mxu0 %v1999
        %2201 = vmatprep.subr.mxu0 %v2002
        %2202 = vmatpush1.msra.mxu0 %v2001
        %2203 = vmatprep.subr.mxu0 %v2004
        %2204 = vmatpush1.msra.mxu0 %v2003
        %2205 = vmatprep.subr.mxu0 %v2006
        %2206 = vmatpush1.msra.mxu0 %v2005
        %2207 = vmatprep.subr.mxu0 %v2008
        %2208 = vmatpush1.msra.mxu0 %v2007
        %2209 = vmatprep.subr.mxu0 %v2010
        %2210 = vmatpush1.msra.mxu0 %v2009
        %2211 = vmatprep.subr.mxu0 %v2012
        %2212 = vmatpush1.msra.mxu0 %v2011
        %2213 = vmatprep.subr.mxu0 %v2014
        %2214 = vmatpush1.msra.mxu0 %v2013
        %2215 = vmatprep.subr.mxu0 %v2016
        %2216 = vmatpush1.msra.mxu0 %v2015
        %2217 = vmatprep.subr.mxu0 %v2018
        %2218 = vmatpush1.msra.mxu0 %v2017
        %2219 = vmatprep.subr.mxu0 %v2020
        %2220 = vmatpush1.msra.mxu0 %v2019
        %2221 = vmatprep.subr.mxu0 %v2022
        %2222 = vmatpush1.msra.mxu0 %v2021
        %2223 = vmatprep.subr.mxu0 %v2024
        %2224 = vmatpush1.msra.mxu0 %v2023
        %2225 = vmatprep.subr.mxu0 %v2026
        %2226 = vmatpush1.msra.mxu0 %v2025
        %2227 = vmatprep.subr.mxu0 %v2028
        %2228 = vmatpush1.msra.mxu0 %v2027
        %2229 = vmatprep.subr.mxu0 %v2030
        %2230 = vmatpush1.msra.mxu0 %v2029
        %2231 = vmatprep.subr.mxu0 %v2032
        %2232 = vmatpush1.msra.mxu0 %v2031
        %2233 = vmatprep.subr.mxu0 %v2034
        %2234 = vmatpush1.msra.mxu0 %v2033
        %2235 = vmatprep.subr.mxu0 %v2036
        %2236 = vmatpush1.msra.mxu0 %v2035
        %2237 = vmatprep.subr.mxu0 %v2038
        %2238 = vmatpush1.msra.mxu0 %v2037
        %2239 = vmatprep.mubr.f32.mxu0 %v1959
        %2240 = vmatmul.mubr.f32.gmra.mrb[0].mxu0 %v1953
        %v2241 = vpop.f32.mrb[0].mxu0
        %v2242 = vadd.f32 %v2171, %v2241
        %v2243 = vpop.f32.mrb[0].mxu0
        %v2244 = vadd.f32 %v2173, %v2243
        %2245 = vdwg.mxu0
        %v2246 = vxor.u32 %v2242, 2147483648
        %v2247 = vxor.u32 %v2244, 2147483648
        %v2248 = vmul.f32 %v2246, 1.442695
        %v2249 = vpow.pop %v2248
        %v2250 = vmul.f32 %v2247, 1.442695
        %v2251 = vpow.pop %v2250
        %v2252 = vadd.f32 %v2249, 1.0
        %v2253 = vadd.f32 %v2251, 1.0
        %v2254 = vrcp.pop %v2252
        %v2255 = vmul.f32 1.0, %v2254
        %v2256 = vrcp.pop %v2253
        %v2257 = vmul.f32 1.0, %v2256
        %v2258 = vlaneseq
        %v2259 = vshrl.u32 %v2258, 7
        %v2260 = vsub.s32 0, %v2259
        %v2261 = vrot.slane %v2255, %v2260
        %v2262 = vlaneseq
        %v2263 = vshrl.u32 %v2262, 7
        %v2264 = vsub.s32 0, %v2263
        %v2265 = vrot.slane %v2257, %v2264
        %v2266 = vmul.f32 %v1946, %v2261
        %v2267 = vmul.f32 %v1947, %v2265
        %v2268 = vmul.f32 %v2266, %v400
        %v2269 = vmul.f32 %v2267, %v401
        %2270 = vst [vmem:[%s394] sm:$0xff] %v2268
        %2271 = vst [vmem:[%s394 + $0x8] sm:$0xff] %v2269
        %s2272 = sand.u32 %s270, 1
        %s2273 = scalar_lea.sflag [#allocation4], %s2272
        %s2274 = sand.u32 %s270, 1
        %s2275 = smul.addr %s2274, 16
        %s2276 = scalar_lea.vmem [#allocation5], %s2275
        // Predicated region
        $region69: #{tpu_custom_call.1} parent=63 // pred_check
          %p2277 = pneg %p280
        $region70: #{tpu_custom_call.1} parent=63 // pred_check_branch
          %2279 = sbr.rel (%p2277) target = $region72
        $region71: #{tpu_custom_call.1} parent=63 // pred_region
          %s2281 = ssub.s32 256, 256
          %2282 = vsyncadd %s2273, %s2281
          %s2283 = smul.addr %s26, 2
          %s2284 = smul.addr %s2283, 128
          %s2285 = scalar_lea.hbm %s11, %s2284
          %s2287 = sshll.u32 %s2276, 4
          %s2288 = int_to_ptr.vmem [resolvable:$true] %s2287
          %2290 = dma.vmem_to_hbm [thread:$0]  %s2288, 256, %s2285, %s2273
        $region72: #{tpu_custom_call.1} parent=63 // pred_fallthru
          _
      $region64: #{tpu_custom_call.1} parent=5 // pred_fallthru
        _
      %p2291 = scmp.le.s32.totalorder 2, %s21
      // Predicated region
      $region73: #{tpu_custom_call.1} parent=5 // pred_check
        %p2292 = pneg %p2291
      $region74: #{tpu_custom_call.1} parent=5 // pred_check_branch
        %2294 = sbr.rel (%p2292) target = $region76
      $region75: #{tpu_custom_call.1} parent=5 // pred_region
        %s2295 = ssub.s32 %s21, 2
        // Predicated region
        $region77: #{tpu_custom_call.1} parent=75 // pred_check
          %p2296 = pneg %p286
        $region78: #{tpu_custom_call.1} parent=75 // pred_check_branch
          %2298 = sbr.rel (%p2296) target = $region80
        $region79: #{tpu_custom_call.1} parent=75 // pred_region
          %s2299 = sand.u32 %s271, 1
          %s2300 = scalar_lea.sflag [#allocation4], %s2299
          %s2301 = sand.u32 %s271, 1
          %s2302 = smul.addr %s2301, 16
          %s2303 = scalar_lea.vmem [#allocation5], %s2302
          %2304 = dma.done %s2300, 256
        $region80: #{tpu_custom_call.1} parent=75 // pred_fallthru
          _
      $region76: #{tpu_custom_call.1} parent=5 // pred_fallthru
        _
    $region6: #{tpu_custom_call.1} parent=1 // loop_footer
      %s25 = sadd.s32 1, %s21
    $region7: #{tpu_custom_call.1} parent=1 // loop_footer_branch
      %20 = sbr.rel target = $region3
    $region8: #{tpu_custom_call.1} parent=1 // loop_exit
      _
    %2305 = vsyncpa [#allocation3], 1
    %s2306 = scalar_lea.sflag [#allocation3], 1
    %2307 = vsyncpa %s2306, 1
    %2308 = vsyncpa [#allocation4], 1
    %s2309 = scalar_lea.sflag [#allocation4], 1
    %2310 = vsyncpa %s2309, 1

</llo_original>
